<compile_context>
chip_gen: v7x
topology: tpu7x:2x2x1
jax: 0.10.0
libtpu: 0.0.40
codegen_flags: <defaults>
</compile_context>

<pallas_src>
import functools

import jax
import jax.numpy as jnp
import numpy as np
from jax.experimental import pallas as pl
from jax.experimental.pallas import tpu as pltpu


def _vmem_capacity_bytes():
    """Per-TensorCore VMEM capacity, with conservative fallbacks."""
    try:
        info = pltpu.get_tpu_info()
        cap = getattr(info, "vmem_capacity_bytes", None)
        if cap:
            return int(cap)
    except Exception:
        pass
    try:
        kind = jax.devices()[0].device_kind.lower()
    except Exception:
        kind = ""
    if "v5" in kind or "v6" in kind:
        return 128 * 2 ** 20
    return 64 * 2 ** 20  # conservative default (v7x per-TC VMEM)


def _lstm_kernel(xp_ref, h0_ref, c0_ref, whh_ref,
                 out_ref, clast_ref,
                 h_sc, c_sc, *, t_chunk, t_rem, precision):
    """One grid step == one chunk of LSTM time steps for one batch block."""
    gc = pl.program_id(1)           # time-chunk index (inner, sequential)
    hp = h_sc.shape[-1]             # padded hidden width (multiple of 128)

    @pl.when(gc == 0)
    def _():
        h_sc[...] = h0_ref[...]
        c_sc[...] = c0_ref[...]

    def run(n_steps):
        def step(t, carry):
            h_prev, c_prev = carry
            # gates = (x_t @ W_ih^T + b) [precomputed] + h_prev @ W_hh^T.
            # W_hh^T is read inside the step so Mosaic streams it VMEM->MXU
            # instead of keeping it live in vregs across the loop.
            gates = xp_ref[t].astype(jnp.float32) + jnp.dot(
                h_prev.astype(whh_ref.dtype), whh_ref[...],
                preferred_element_type=jnp.float32, precision=precision)
            # PyTorch gate order [i, f, g, o]; slices are 128-lane aligned
            # because hp % 128 == 0.  Gate math stays in f32 (v5e-safe).
            i_g = jax.nn.sigmoid(gates[:, 0 * hp:1 * hp])
            f_g = jax.nn.sigmoid(gates[:, 1 * hp:2 * hp])
            g_g = jnp.tanh(gates[:, 2 * hp:3 * hp])
            o_g = jax.nn.sigmoid(gates[:, 3 * hp:4 * hp])
            c_new = f_g * c_prev + i_g * g_g
            h_new = o_g * jnp.tanh(c_new)
            out_ref[t] = h_new           # VMEM write; HBM DMA once per chunk
            return h_new, c_new

        unroll = True if n_steps <= 16 else 8
        h_fin, c_fin = jax.lax.fori_loop(0, n_steps, step,
                                         (h_sc[...], c_sc[...]),
                                         unroll=unroll)
        h_sc[...] = h_fin
        c_sc[...] = c_fin

    if t_rem == 0:
        # All chunks full: no per-step masking, no runtime branch.
        run(t_chunk)
    else:
        last = pl.num_programs(1) - 1

        @pl.when(gc != last)
        def _():
            run(t_chunk)

        @pl.when(gc == last)
        def _():
            run(t_rem)        # statically shorter tail loop; no per-step mask

    # Written every chunk (cheap) so the resident output block is never
    # uninitialized VMEM; only the final value survives.
    clast_ref[...] = c_sc[...]


def lstm_decoder(x, params, h_0=None, c_0=None, *, use_bf16=True):
    """Forward pass matching PyTorch LSTMDecoder.forward.

    x:   (B, T, input_size) float32   (batch_first=True)
    h_0: optional (1, B, H)
    c_0: optional (1, B, H)
    Returns (output (B, T, H), (last_hidden (1, B, H), last_cell (1, B, H))).
    """
    w_ih, w_hh, b_ih, b_hh = params            # (4H,I), (4H,H), (4H,), (4H,)
    B, T, I = x.shape
    H = w_hh.shape[1]

    x = x.astype(jnp.float32)
    w_ih = w_ih.astype(jnp.float32)
    w_hh = w_hh.astype(jnp.float32)
    bias = (b_ih + b_hh).astype(jnp.float32)

    # ---- gate-aligned hidden padding (multiple of 128 lanes) ---------------
    Hp = -(-H // 128) * 128
    Gp = 4 * Hp
    cdt = jnp.bfloat16 if use_bf16 else jnp.float32
    cdt_size = 2 if use_bf16 else 4
    prec = (jax.lax.Precision.DEFAULT if use_bf16
            else jax.lax.Precision.HIGHEST)

    def pad_gate_rows(w):                      # (4H, X) -> (4Hp, X), per gate
        X = w.shape[1]
        return jnp.pad(w.reshape(4, H, X),
                       ((0, 0), (0, Hp - H), (0, 0))).reshape(4 * Hp, X)

    w_ih_p = pad_gate_rows(w_ih)                                     # (4Hp, I)
    bias_p = jnp.pad(bias.reshape(4, H),
                     ((0, 0), (0, Hp - H))).reshape(Gp)              # (4Hp,)
    w_hh_p = jnp.pad(pad_gate_rows(w_hh).T,
                     ((0, Hp - H), (0, 0))).astype(cdt)              # (Hp, 4Hp)

    if h_0 is None:
        h0 = jnp.zeros((B, H), jnp.float32)
    else:
        h0 = h_0.reshape(B, H).astype(jnp.float32)
    if c_0 is None:
        c0 = jnp.zeros((B, H), jnp.float32)
    else:
        c0 = c_0.reshape(B, H).astype(jnp.float32)

    # ---- hoisted input projection, produced directly time-major -----------
    # Transpose only the I-wide x, then one (T,B,I)x(I,4Hp) MXU matmul; the
    # big (T,B,4Hp) tensor is never transposed.  Stream it in bf16.
    x_tm = jnp.transpose(x, (1, 0, 2))                               # (T,B,I)
    xp = (jnp.dot(x_tm, w_ih_p.T, precision=prec) + bias_p).astype(cdt)

    # ---- batch padding / optional 2-way split (v7x second TensorCore) -----
    n_b_blocks = 2 if B >= 16 else 1
    bb = -(-B // (8 * n_b_blocks)) * 8          # sublane-aligned block batch
    B_pad = bb * n_b_blocks

    # ---- VMEM-budget-driven time chunking ----------------------------------
    vmem_cap = _vmem_capacity_bytes()
    per_step = bb * (2 * Gp * cdt_size          # xp chunk, double-buffered
                     + 2 * Hp * 4)              # out slab (f32), double-buffered
    fixed = 2 * Hp * Gp * cdt_size + 12 * bb * Hp * 4   # W_hh^T, h0/c0, carries
    budget = max(int(vmem_cap * 0.5) - fixed, per_step)
    t_chunk = int(max(1, min(T, budget // per_step, 256)))
    num_chunks = -(-T // t_chunk)
    t_rem = T % t_chunk
    T_pad = num_chunks * t_chunk
    vmem_limit = int(vmem_cap * 0.75)

    xp = jnp.pad(xp, ((0, T_pad - T), (0, B_pad - B), (0, 0)))
    h0 = jnp.pad(h0, ((0, B_pad - B), (0, Hp - H)))
    c0 = jnp.pad(c0, ((0, B_pad - B), (0, Hp - H)))

    kernel = functools.partial(_lstm_kernel, t_chunk=t_chunk, t_rem=t_rem,
                               precision=prec)

    grid_spec = pltpu.PrefetchScalarGridSpec(
        num_scalar_prefetch=0,
        grid=(n_b_blocks, num_chunks),
        in_specs=[
            pl.BlockSpec((t_chunk, bb, Gp), lambda b, g: (g, b, 0)),  # xp chunk
            pl.BlockSpec((bb, Hp), lambda b, g: (b, 0)),              # h0
            pl.BlockSpec((bb, Hp), lambda b, g: (b, 0)),              # c0
            pl.BlockSpec((Hp, Gp), lambda b, g: (0, 0)),              # W_hh^T
        ],
        out_specs=[
            pl.BlockSpec((t_chunk, bb, Hp), lambda b, g: (g, b, 0)),  # h slab
            pl.BlockSpec((bb, Hp), lambda b, g: (b, 0)),              # c_last
        ],
        scratch_shapes=[
            pltpu.VMEM((bb, Hp), jnp.float32),   # h carry across chunks
            pltpu.VMEM((bb, Hp), jnp.float32),   # c carry across chunks
        ],
    )

    out_tm, c_last = pl.pallas_call(
        kernel,
        out_shape=(
            jax.ShapeDtypeStruct((T_pad, B_pad, Hp), jnp.float32),
            jax.ShapeDtypeStruct((B_pad, Hp), jnp.float32),
        ),
        grid_spec=grid_spec,
        compiler_params=pltpu.CompilerParams(
            dimension_semantics=("parallel", "arbitrary"),  # batch ∥, time seq
            vmem_limit_bytes=vmem_limit),
    )(xp, h0, c0, w_hh_p)

    output = jnp.transpose(out_tm[:T, :B, :H], (1, 0, 2))   # (B, T, H)
    h_last = out_tm[T - 1, :B, :H]                          # last valid hidden
    c_last = c_last[:B, :H]
    return output, (h_last[None], c_last[None])             # match (1, B, H)


def lstm_reference(x, params, h_0=None, c_0=None):
    """Pure-JAX f32 reference (lax.scan, Precision.HIGHEST) mirroring nn.LSTM."""
    w_ih, w_hh, b_ih, b_hh = params
    B, T, I = x.shape
    H = w_hh.shape[1]
    hi = jax.lax.Precision.HIGHEST
    h = jnp.zeros((B, H), jnp.float32) if h_0 is None else h_0.reshape(B, H)
    c = jnp.zeros((B, H), jnp.float32) if c_0 is None else c_0.reshape(B, H)

    def step(carry, x_t):
        h, c = carry
        gates = (jnp.dot(x_t, w_ih.T, precision=hi)
                 + jnp.dot(h, w_hh.T, precision=hi) + b_ih + b_hh)
        i, f, g, o = jnp.split(gates, 4, axis=-1)
        c_new = jax.nn.sigmoid(f) * c + jax.nn.sigmoid(i) * jnp.tanh(g)
        h_new = jax.nn.sigmoid(o) * jnp.tanh(c_new)
        return (h_new, c_new), h_new

    (h_last, c_last), out_tm = jax.lax.scan(step, (h, c),
                                            jnp.transpose(x, (1, 0, 2)))
    return jnp.transpose(out_tm, (1, 0, 2)), (h_last[None], c_last[None])


def init_params(key, input_size, hidden_size):
    """Deterministic init with PyTorch nn.LSTM shapes: U(-1/sqrt(H), 1/sqrt(H))."""
    k = 1.0 / np.sqrt(hidden_size)
    keys = jax.random.split(key, 4)
    w_ih = jax.random.uniform(keys[0], (4 * hidden_size, input_size),
                              jnp.float32, -k, k)
    w_hh = jax.random.uniform(keys[1], (4 * hidden_size, hidden_size),
                              jnp.float32, -k, k)
    b_ih = jax.random.uniform(keys[2], (4 * hidden_size,), jnp.float32, -k, k)
    b_hh = jax.random.uniform(keys[3], (4 * hidden_size,), jnp.float32, -k, k)
    return w_ih, w_hh, b_ih, b_hh


if __name__ == "__main__":
    B, T, INPUT_SIZE, HIDDEN_SIZE = 2, 8, 4, 32

    root = jax.random.PRNGKey(0)
    k_param, k_x, k_h, k_c = jax.random.split(root, 4)

    params = init_params(k_param, INPUT_SIZE, HIDDEN_SIZE)
    x = jax.random.normal(k_x, (B, T, INPUT_SIZE), jnp.float32)
    h_0 = jax.random.normal(k_h, (1, B, HIDDEN_SIZE), jnp.float32)
    c_0 = jax.random.normal(k_c, (1, B, HIDDEN_SIZE), jnp.float32)

    # Path 1/2: default bf16-streamed kernel, zero and explicit initial state.
    out0, (h0_last, c0_last) = lstm_decoder(x, params)
    out1, (h1_last, c1_last) = lstm_decoder(x, params, h_0, c_0)
    # Path 3: precision knob — full f32 with Precision.HIGHEST (parity path).
    out2, (h2_last, c2_last) = lstm_decoder(x, params, h_0, c_0, use_bf16=False)
    jax.block_until_ready((out0, h0_last, c0_last,
                           out1, h1_last, c1_last,
                           out2, h2_last, c2_last))

    ref0, (rh0, rc0) = lstm_reference(x, params)
    ref1, (rh1, rc1) = lstm_reference(x, params, h_0, c_0)

    # bf16 streaming of xp / W_hh^T (plus default MXU precision) drifts vs the
    # f32 HIGHEST reference, compounded over T recurrent steps -> loose tol.
    # Real bugs (gate order, transposed weights, missing bias) are O(0.1-1).
    tol_bf16 = dict(rtol=2e-2, atol=2e-2)
    # The f32 / Precision.HIGHEST path must match the reference tightly.
    tol_f32 = dict(rtol=1e-4, atol=1e-4)

    np.testing.assert_allclose(np.asarray(out0), np.asarray(ref0), **tol_bf16)
    np.testing.assert_allclose(np.asarray(h0_last), np.asarray(rh0), **tol_bf16)
    np.testing.assert_allclose(np.asarray(c0_last), np.asarray(rc0), **tol_bf16)
    np.testing.assert_allclose(np.asarray(out1), np.asarray(ref1), **tol_bf16)
    np.testing.assert_allclose(np.asarray(h1_last), np.asarray(rh1), **tol_bf16)
    np.testing.assert_allclose(np.asarray(c1_last), np.asarray(rc1), **tol_bf16)
    np.testing.assert_allclose(np.asarray(out2), np.asarray(ref1), **tol_f32)
    np.testing.assert_allclose(np.asarray(h2_last), np.asarray(rh1), **tol_f32)
    np.testing.assert_allclose(np.asarray(c2_last), np.asarray(rc1), **tol_f32)

    print("KERNEL_OK")
</pallas_src>

<mosaic_0001>
module attributes {stable_mosaic.version = 11 : i64} {
  func.func @_lstm_kernel(%arg0: i32, %arg1: i32, %arg2: memref<8x8x512xbf16, #tpu.memory_space<vmem>>, %arg3: memref<8x128xf32, #tpu.memory_space<vmem>>, %arg4: memref<8x128xf32, #tpu.memory_space<vmem>>, %arg5: memref<128x512xbf16, #tpu.memory_space<vmem>>, %arg6: memref<8x8x128xf32, #tpu.memory_space<vmem>>, %arg7: memref<8x128xf32, #tpu.memory_space<vmem>>, %arg8: memref<8x128xf32, #tpu.memory_space<vmem>>, %arg9: memref<8x128xf32, #tpu.memory_space<vmem>>) attributes {dimension_semantics = [#tpu.dimension_semantics<parallel>, #tpu.dimension_semantics<arbitrary>], iteration_bounds = array<i64: 1, 1>, scalar_prefetch = 0 : i64, scratch_operands = 2 : i64, tpu.core_type = #tpu.core_type<tc>, window_params = [{transform_indices = @transform_0, window_bounds = array<i64: 8, 8, 512>}, {transform_indices = @transform_1, window_bounds = array<i64: 8, 128>}, {transform_indices = @transform_2, window_bounds = array<i64: 8, 128>}, {pipeline_mode = #tpu.pipeline_mode<synchronous>, transform_indices = @transform_3, window_bounds = array<i64: 128, 512>}, {transform_indices = @transform_4, window_bounds = array<i64: 8, 8, 128>}, {transform_indices = @transform_5, window_bounds = array<i64: 8, 128>}]} {
    %c0_i32 = arith.constant 0 : i32
    %0 = arith.cmpi eq, %arg1, %c0_i32 : i32
    %1 = arith.extui %0 : i1 to i32
    %c0_i32_0 = arith.constant 0 : i32
    %2 = arith.cmpi ne, %1, %c0_i32_0 : i32
    scf.if %2 {
      %c0_92 = arith.constant 0 : index
      %c0_93 = arith.constant 0 : index
      %305 = vector.load %arg3[%c0_92, %c0_93] : memref<8x128xf32, #tpu.memory_space<vmem>>, vector<8x128xf32>
      %c0_94 = arith.constant 0 : index
      %c0_95 = arith.constant 0 : index
      %306 = vector.load %arg8[%c0_94, %c0_95] : memref<8x128xf32, #tpu.memory_space<vmem>>, vector<8x128xf32>
      tpu.vector_store %arg8[%c0_94, %c0_95], %305 {strides = array<i32>} : memref<8x128xf32, #tpu.memory_space<vmem>>, vector<8x128xf32>,
      %c0_96 = arith.constant 0 : index
      %c0_97 = arith.constant 0 : index
      %307 = vector.load %arg4[%c0_96, %c0_97] : memref<8x128xf32, #tpu.memory_space<vmem>>, vector<8x128xf32>
      %c0_98 = arith.constant 0 : index
      %c0_99 = arith.constant 0 : index
      %308 = vector.load %arg9[%c0_98, %c0_99] : memref<8x128xf32, #tpu.memory_space<vmem>>, vector<8x128xf32>
      tpu.vector_store %arg9[%c0_98, %c0_99], %307 {strides = array<i32>} : memref<8x128xf32, #tpu.memory_space<vmem>>, vector<8x128xf32>,
    } else {
    }
    %c0 = arith.constant 0 : index
    %c0_1 = arith.constant 0 : index
    %3 = vector.load %arg8[%c0, %c0_1] : memref<8x128xf32, #tpu.memory_space<vmem>>, vector<8x128xf32>
    %c0_2 = arith.constant 0 : index
    %c0_3 = arith.constant 0 : index
    %4 = vector.load %arg9[%c0_2, %c0_3] : memref<8x128xf32, #tpu.memory_space<vmem>>, vector<8x128xf32>
    %c0_i32_4 = arith.constant 0 : i32
    %5 = arith.index_cast %c0_i32_4 : i32 to index
    %c0_5 = arith.constant 0 : index
    %c0_6 = arith.constant 0 : index
    %6 = vector.load %arg2[%5, %c0_5, %c0_6] : memref<8x8x512xbf16, #tpu.memory_space<vmem>>, vector<1x8x512xbf16>
    %7 = vector.shape_cast %6 : vector<1x8x512xbf16> to vector<8x512xbf16>
    %8 = arith.extf %7 : vector<8x512xbf16> to vector<8x512xf32>
    %9 = arith.truncf %3 : vector<8x128xf32> to vector<8x128xbf16>
    %c0_7 = arith.constant 0 : index
    %c0_8 = arith.constant 0 : index
    %10 = vector.load %arg5[%c0_7, %c0_8] : memref<128x512xbf16, #tpu.memory_space<vmem>>, vector<128x512xbf16>
    %cst = arith.constant dense<0.000000e+00> : vector<8x512xf32>
    %11 = tpu.matmul %9, %10, %cst {dimension_numbers = #tpu.dot_dimension_numbers<[1], [0], [0], [1], [0, 0, 1, 1], [], []>} : vector<8x128xbf16>, vector<128x512xbf16>, vector<8x512xf32> -> vector<8x512xf32>
    %12 = arith.addf %8, %11 : vector<8x512xf32>
    %13 = vector.extract_strided_slice %12 {offsets = [0, 0], sizes = [8, 128], strides = [1, 1]} : vector<8x512xf32> to vector<8x128xf32>
    %14 = arith.negf %13 : vector<8x128xf32>
    %15 = math.exp %14 : vector<8x128xf32>
    %cst_9 = arith.constant 1.000000e+00 : f32
    %16 = vector.broadcast %cst_9 : f32 to vector<8x128xf32>
    %17 = arith.addf %16, %15 : vector<8x128xf32>
    %18 = arith.divf %16, %17 : vector<8x128xf32>
    %19 = vector.extract_strided_slice %12 {offsets = [0, 128], sizes = [8, 128], strides = [1, 1]} : vector<8x512xf32> to vector<8x128xf32>
    %20 = arith.negf %19 : vector<8x128xf32>
    %21 = math.exp %20 : vector<8x128xf32>
    %cst_10 = arith.constant 1.000000e+00 : f32
    %22 = vector.broadcast %cst_10 : f32 to vector<8x128xf32>
    %23 = arith.addf %22, %21 : vector<8x128xf32>
    %24 = arith.divf %22, %23 : vector<8x128xf32>
    %25 = vector.extract_strided_slice %12 {offsets = [0, 256], sizes = [8, 128], strides = [1, 1]} : vector<8x512xf32> to vector<8x128xf32>
    %26 = math.tanh %25 : vector<8x128xf32>
    %27 = vector.extract_strided_slice %12 {offsets = [0, 384], sizes = [8, 128], strides = [1, 1]} : vector<8x512xf32> to vector<8x128xf32>
    %28 = arith.negf %27 : vector<8x128xf32>
    %29 = math.exp %28 : vector<8x128xf32>
    %cst_11 = arith.constant 1.000000e+00 : f32
    %30 = vector.broadcast %cst_11 : f32 to vector<8x128xf32>
    %31 = arith.addf %30, %29 : vector<8x128xf32>
    %32 = arith.divf %30, %31 : vector<8x128xf32>
    %33 = arith.mulf %24, %4 : vector<8x128xf32>
    %34 = arith.mulf %18, %26 : vector<8x128xf32>
    %35 = arith.addf %33, %34 : vector<8x128xf32>
    %36 = math.tanh %35 : vector<8x128xf32>
    %37 = arith.mulf %32, %36 : vector<8x128xf32>
    %38 = arith.index_cast %c0_i32_4 : i32 to index
    %c0_12 = arith.constant 0 : index
    %c0_13 = arith.constant 0 : index
    %39 = vector.load %arg6[%38, %c0_12, %c0_13] : memref<8x8x128xf32, #tpu.memory_space<vmem>>, vector<1x8x128xf32>
    %40 = vector.shape_cast %39 : vector<1x8x128xf32> to vector<8x128xf32>
    %41 = vector.shape_cast %37 : vector<8x128xf32> to vector<1x8x128xf32>
    tpu.vector_store %arg6[%38, %c0_12, %c0_13], %41 {strides = array<i32>} : memref<8x8x128xf32, #tpu.memory_space<vmem>>, vector<1x8x128xf32>,
    %c1_i32 = arith.constant 1 : i32
    %42 = arith.index_cast %c1_i32 : i32 to index
    %c0_14 = arith.constant 0 : index
    %c0_15 = arith.constant 0 : index
    %43 = vector.load %arg2[%42, %c0_14, %c0_15] : memref<8x8x512xbf16, #tpu.memory_space<vmem>>, vector<1x8x512xbf16>
    %44 = vector.shape_cast %43 : vector<1x8x512xbf16> to vector<8x512xbf16>
    %45 = arith.extf %44 : vector<8x512xbf16> to vector<8x512xf32>
    %46 = arith.truncf %37 : vector<8x128xf32> to vector<8x128xbf16>
    %c0_16 = arith.constant 0 : index
    %c0_17 = arith.constant 0 : index
    %47 = vector.load %arg5[%c0_16, %c0_17] : memref<128x512xbf16, #tpu.memory_space<vmem>>, vector<128x512xbf16>
    %cst_18 = arith.constant dense<0.000000e+00> : vector<8x512xf32>
    %48 = tpu.matmul %46, %47, %cst_18 {dimension_numbers = #tpu.dot_dimension_numbers<[1], [0], [0], [1], [0, 0, 1, 1], [], []>} : vector<8x128xbf16>, vector<128x512xbf16>, vector<8x512xf32> -> vector<8x512xf32>
    %49 = arith.addf %45, %48 : vector<8x512xf32>
    %50 = vector.extract_strided_slice %49 {offsets = [0, 0], sizes = [8, 128], strides = [1, 1]} : vector<8x512xf32> to vector<8x128xf32>
    %51 = arith.negf %50 : vector<8x128xf32>
    %52 = math.exp %51 : vector<8x128xf32>
    %cst_19 = arith.constant 1.000000e+00 : f32
    %53 = vector.broadcast %cst_19 : f32 to vector<8x128xf32>
    %54 = arith.addf %53, %52 : vector<8x128xf32>
    %55 = arith.divf %53, %54 : vector<8x128xf32>
    %56 = vector.extract_strided_slice %49 {offsets = [0, 128], sizes = [8, 128], strides = [1, 1]} : vector<8x512xf32> to vector<8x128xf32>
    %57 = arith.negf %56 : vector<8x128xf32>
    %58 = math.exp %57 : vector<8x128xf32>
    %cst_20 = arith.constant 1.000000e+00 : f32
    %59 = vector.broadcast %cst_20 : f32 to vector<8x128xf32>
    %60 = arith.addf %59, %58 : vector<8x128xf32>
    %61 = arith.divf %59, %60 : vector<8x128xf32>
    %62 = vector.extract_strided_slice %49 {offsets = [0, 256], sizes = [8, 128], strides = [1, 1]} : vector<8x512xf32> to vector<8x128xf32>
    %63 = math.tanh %62 : vector<8x128xf32>
    %64 = vector.extract_strided_slice %49 {offsets = [0, 384], sizes = [8, 128], strides = [1, 1]} : vector<8x512xf32> to vector<8x128xf32>
    %65 = arith.negf %64 : vector<8x128xf32>
    %66 = math.exp %65 : vector<8x128xf32>
    %cst_21 = arith.constant 1.000000e+00 : f32
    %67 = vector.broadcast %cst_21 : f32 to vector<8x128xf32>
    %68 = arith.addf %67, %66 : vector<8x128xf32>
    %69 = arith.divf %67, %68 : vector<8x128xf32>
    %70 = arith.mulf %61, %35 : vector<8x128xf32>
    %71 = arith.mulf %55, %63 : vector<8x128xf32>
    %72 = arith.addf %70, %71 : vector<8x128xf32>
    %73 = math.tanh %72 : vector<8x128xf32>
    %74 = arith.mulf %69, %73 : vector<8x128xf32>
    %75 = arith.index_cast %c1_i32 : i32 to index
    %c0_22 = arith.constant 0 : index
    %c0_23 = arith.constant 0 : index
    %76 = vector.load %arg6[%75, %c0_22, %c0_23] : memref<8x8x128xf32, #tpu.memory_space<vmem>>, vector<1x8x128xf32>
    %77 = vector.shape_cast %76 : vector<1x8x128xf32> to vector<8x128xf32>
    %78 = vector.shape_cast %74 : vector<8x128xf32> to vector<1x8x128xf32>
    tpu.vector_store %arg6[%75, %c0_22, %c0_23], %78 {strides = array<i32>} : memref<8x8x128xf32, #tpu.memory_space<vmem>>, vector<1x8x128xf32>,
    %c2_i32 = arith.constant 2 : i32
    %79 = arith.index_cast %c2_i32 : i32 to index
    %c0_24 = arith.constant 0 : index
    %c0_25 = arith.constant 0 : index
    %80 = vector.load %arg2[%79, %c0_24, %c0_25] : memref<8x8x512xbf16, #tpu.memory_space<vmem>>, vector<1x8x512xbf16>
    %81 = vector.shape_cast %80 : vector<1x8x512xbf16> to vector<8x512xbf16>
    %82 = arith.extf %81 : vector<8x512xbf16> to vector<8x512xf32>
    %83 = arith.truncf %74 : vector<8x128xf32> to vector<8x128xbf16>
    %c0_26 = arith.constant 0 : index
    %c0_27 = arith.constant 0 : index
    %84 = vector.load %arg5[%c0_26, %c0_27] : memref<128x512xbf16, #tpu.memory_space<vmem>>, vector<128x512xbf16>
    %cst_28 = arith.constant dense<0.000000e+00> : vector<8x512xf32>
    %85 = tpu.matmul %83, %84, %cst_28 {dimension_numbers = #tpu.dot_dimension_numbers<[1], [0], [0], [1], [0, 0, 1, 1], [], []>} : vector<8x128xbf16>, vector<128x512xbf16>, vector<8x512xf32> -> vector<8x512xf32>
    %86 = arith.addf %82, %85 : vector<8x512xf32>
    %87 = vector.extract_strided_slice %86 {offsets = [0, 0], sizes = [8, 128], strides = [1, 1]} : vector<8x512xf32> to vector<8x128xf32>
    %88 = arith.negf %87 : vector<8x128xf32>
    %89 = math.exp %88 : vector<8x128xf32>
    %cst_29 = arith.constant 1.000000e+00 : f32
    %90 = vector.broadcast %cst_29 : f32 to vector<8x128xf32>
    %91 = arith.addf %90, %89 : vector<8x128xf32>
    %92 = arith.divf %90, %91 : vector<8x128xf32>
    %93 = vector.extract_strided_slice %86 {offsets = [0, 128], sizes = [8, 128], strides = [1, 1]} : vector<8x512xf32> to vector<8x128xf32>
    %94 = arith.negf %93 : vector<8x128xf32>
    %95 = math.exp %94 : vector<8x128xf32>
    %cst_30 = arith.constant 1.000000e+00 : f32
    %96 = vector.broadcast %cst_30 : f32 to vector<8x128xf32>
    %97 = arith.addf %96, %95 : vector<8x128xf32>
    %98 = arith.divf %96, %97 : vector<8x128xf32>
    %99 = vector.extract_strided_slice %86 {offsets = [0, 256], sizes = [8, 128], strides = [1, 1]} : vector<8x512xf32> to vector<8x128xf32>
    %100 = math.tanh %99 : vector<8x128xf32>
    %101 = vector.extract_strided_slice %86 {offsets = [0, 384], sizes = [8, 128], strides = [1, 1]} : vector<8x512xf32> to vector<8x128xf32>
    %102 = arith.negf %101 : vector<8x128xf32>
    %103 = math.exp %102 : vector<8x128xf32>
    %cst_31 = arith.constant 1.000000e+00 : f32
    %104 = vector.broadcast %cst_31 : f32 to vector<8x128xf32>
    %105 = arith.addf %104, %103 : vector<8x128xf32>
    %106 = arith.divf %104, %105 : vector<8x128xf32>
    %107 = arith.mulf %98, %72 : vector<8x128xf32>
    %108 = arith.mulf %92, %100 : vector<8x128xf32>
    %109 = arith.addf %107, %108 : vector<8x128xf32>
    %110 = math.tanh %109 : vector<8x128xf32>
    %111 = arith.mulf %106, %110 : vector<8x128xf32>
    %112 = arith.index_cast %c2_i32 : i32 to index
    %c0_32 = arith.constant 0 : index
    %c0_33 = arith.constant 0 : index
    %113 = vector.load %arg6[%112, %c0_32, %c0_33] : memref<8x8x128xf32, #tpu.memory_space<vmem>>, vector<1x8x128xf32>
    %114 = vector.shape_cast %113 : vector<1x8x128xf32> to vector<8x128xf32>
    %115 = vector.shape_cast %111 : vector<8x128xf32> to vector<1x8x128xf32>
    tpu.vector_store %arg6[%112, %c0_32, %c0_33], %115 {strides = array<i32>} : memref<8x8x128xf32, #tpu.memory_space<vmem>>, vector<1x8x128xf32>,
    %c3_i32 = arith.constant 3 : i32
    %116 = arith.index_cast %c3_i32 : i32 to index
    %c0_34 = arith.constant 0 : index
    %c0_35 = arith.constant 0 : index
    %117 = vector.load %arg2[%116, %c0_34, %c0_35] : memref<8x8x512xbf16, #tpu.memory_space<vmem>>, vector<1x8x512xbf16>
    %118 = vector.shape_cast %117 : vector<1x8x512xbf16> to vector<8x512xbf16>
    %119 = arith.extf %118 : vector<8x512xbf16> to vector<8x512xf32>
    %120 = arith.truncf %111 : vector<8x128xf32> to vector<8x128xbf16>
    %c0_36 = arith.constant 0 : index
    %c0_37 = arith.constant 0 : index
    %121 = vector.load %arg5[%c0_36, %c0_37] : memref<128x512xbf16, #tpu.memory_space<vmem>>, vector<128x512xbf16>
    %cst_38 = arith.constant dense<0.000000e+00> : vector<8x512xf32>
    %122 = tpu.matmul %120, %121, %cst_38 {dimension_numbers = #tpu.dot_dimension_numbers<[1], [0], [0], [1], [0, 0, 1, 1], [], []>} : vector<8x128xbf16>, vector<128x512xbf16>, vector<8x512xf32> -> vector<8x512xf32>
    %123 = arith.addf %119, %122 : vector<8x512xf32>
    %124 = vector.extract_strided_slice %123 {offsets = [0, 0], sizes = [8, 128], strides = [1, 1]} : vector<8x512xf32> to vector<8x128xf32>
    %125 = arith.negf %124 : vector<8x128xf32>
    %126 = math.exp %125 : vector<8x128xf32>
    %cst_39 = arith.constant 1.000000e+00 : f32
    %127 = vector.broadcast %cst_39 : f32 to vector<8x128xf32>
    %128 = arith.addf %127, %126 : vector<8x128xf32>
    %129 = arith.divf %127, %128 : vector<8x128xf32>
    %130 = vector.extract_strided_slice %123 {offsets = [0, 128], sizes = [8, 128], strides = [1, 1]} : vector<8x512xf32> to vector<8x128xf32>
    %131 = arith.negf %130 : vector<8x128xf32>
    %132 = math.exp %131 : vector<8x128xf32>
    %cst_40 = arith.constant 1.000000e+00 : f32
    %133 = vector.broadcast %cst_40 : f32 to vector<8x128xf32>
    %134 = arith.addf %133, %132 : vector<8x128xf32>
    %135 = arith.divf %133, %134 : vector<8x128xf32>
    %136 = vector.extract_strided_slice %123 {offsets = [0, 256], sizes = [8, 128], strides = [1, 1]} : vector<8x512xf32> to vector<8x128xf32>
    %137 = math.tanh %136 : vector<8x128xf32>
    %138 = vector.extract_strided_slice %123 {offsets = [0, 384], sizes = [8, 128], strides = [1, 1]} : vector<8x512xf32> to vector<8x128xf32>
    %139 = arith.negf %138 : vector<8x128xf32>
    %140 = math.exp %139 : vector<8x128xf32>
    %cst_41 = arith.constant 1.000000e+00 : f32
    %141 = vector.broadcast %cst_41 : f32 to vector<8x128xf32>
    %142 = arith.addf %141, %140 : vector<8x128xf32>
    %143 = arith.divf %141, %142 : vector<8x128xf32>
    %144 = arith.mulf %135, %109 : vector<8x128xf32>
    %145 = arith.mulf %129, %137 : vector<8x128xf32>
    %146 = arith.addf %144, %145 : vector<8x128xf32>
    %147 = math.tanh %146 : vector<8x128xf32>
    %148 = arith.mulf %143, %147 : vector<8x128xf32>
    %149 = arith.index_cast %c3_i32 : i32 to index
    %c0_42 = arith.constant 0 : index
    %c0_43 = arith.constant 0 : index
    %150 = vector.load %arg6[%149, %c0_42, %c0_43] : memref<8x8x128xf32, #tpu.memory_space<vmem>>, vector<1x8x128xf32>
    %151 = vector.shape_cast %150 : vector<1x8x128xf32> to vector<8x128xf32>
    %152 = vector.shape_cast %148 : vector<8x128xf32> to vector<1x8x128xf32>
    tpu.vector_store %arg6[%149, %c0_42, %c0_43], %152 {strides = array<i32>} : memref<8x8x128xf32, #tpu.memory_space<vmem>>, vector<1x8x128xf32>,
    %c4_i32 = arith.constant 4 : i32
    %153 = arith.index_cast %c4_i32 : i32 to index
    %c0_44 = arith.constant 0 : index
    %c0_45 = arith.constant 0 : index
    %154 = vector.load %arg2[%153, %c0_44, %c0_45] : memref<8x8x512xbf16, #tpu.memory_space<vmem>>, vector<1x8x512xbf16>
    %155 = vector.shape_cast %154 : vector<1x8x512xbf16> to vector<8x512xbf16>
    %156 = arith.extf %155 : vector<8x512xbf16> to vector<8x512xf32>
    %157 = arith.truncf %148 : vector<8x128xf32> to vector<8x128xbf16>
    %c0_46 = arith.constant 0 : index
    %c0_47 = arith.constant 0 : index
    %158 = vector.load %arg5[%c0_46, %c0_47] : memref<128x512xbf16, #tpu.memory_space<vmem>>, vector<128x512xbf16>
    %cst_48 = arith.constant dense<0.000000e+00> : vector<8x512xf32>
    %159 = tpu.matmul %157, %158, %cst_48 {dimension_numbers = #tpu.dot_dimension_numbers<[1], [0], [0], [1], [0, 0, 1, 1], [], []>} : vector<8x128xbf16>, vector<128x512xbf16>, vector<8x512xf32> -> vector<8x512xf32>
    %160 = arith.addf %156, %159 : vector<8x512xf32>
    %161 = vector.extract_strided_slice %160 {offsets = [0, 0], sizes = [8, 128], strides = [1, 1]} : vector<8x512xf32> to vector<8x128xf32>
    %162 = arith.negf %161 : vector<8x128xf32>
    %163 = math.exp %162 : vector<8x128xf32>
    %cst_49 = arith.constant 1.000000e+00 : f32
    %164 = vector.broadcast %cst_49 : f32 to vector<8x128xf32>
    %165 = arith.addf %164, %163 : vector<8x128xf32>
    %166 = arith.divf %164, %165 : vector<8x128xf32>
    %167 = vector.extract_strided_slice %160 {offsets = [0, 128], sizes = [8, 128], strides = [1, 1]} : vector<8x512xf32> to vector<8x128xf32>
    %168 = arith.negf %167 : vector<8x128xf32>
    %169 = math.exp %168 : vector<8x128xf32>
    %cst_50 = arith.constant 1.000000e+00 : f32
    %170 = vector.broadcast %cst_50 : f32 to vector<8x128xf32>
    %171 = arith.addf %170, %169 : vector<8x128xf32>
    %172 = arith.divf %170, %171 : vector<8x128xf32>
    %173 = vector.extract_strided_slice %160 {offsets = [0, 256], sizes = [8, 128], strides = [1, 1]} : vector<8x512xf32> to vector<8x128xf32>
    %174 = math.tanh %173 : vector<8x128xf32>
    %175 = vector.extract_strided_slice %160 {offsets = [0, 384], sizes = [8, 128], strides = [1, 1]} : vector<8x512xf32> to vector<8x128xf32>
    %176 = arith.negf %175 : vector<8x128xf32>
    %177 = math.exp %176 : vector<8x128xf32>
    %cst_51 = arith.constant 1.000000e+00 : f32
    %178 = vector.broadcast %cst_51 : f32 to vector<8x128xf32>
    %179 = arith.addf %178, %177 : vector<8x128xf32>
    %180 = arith.divf %178, %179 : vector<8x128xf32>
    %181 = arith.mulf %172, %146 : vector<8x128xf32>
    %182 = arith.mulf %166, %174 : vector<8x128xf32>
    %183 = arith.addf %181, %182 : vector<8x128xf32>
    %184 = math.tanh %183 : vector<8x128xf32>
    %185 = arith.mulf %180, %184 : vector<8x128xf32>
    %186 = arith.index_cast %c4_i32 : i32 to index
    %c0_52 = arith.constant 0 : index
    %c0_53 = arith.constant 0 : index
    %187 = vector.load %arg6[%186, %c0_52, %c0_53] : memref<8x8x128xf32, #tpu.memory_space<vmem>>, vector<1x8x128xf32>
    %188 = vector.shape_cast %187 : vector<1x8x128xf32> to vector<8x128xf32>
    %189 = vector.shape_cast %185 : vector<8x128xf32> to vector<1x8x128xf32>
    tpu.vector_store %arg6[%186, %c0_52, %c0_53], %189 {strides = array<i32>} : memref<8x8x128xf32, #tpu.memory_space<vmem>>, vector<1x8x128xf32>,
    %c5_i32 = arith.constant 5 : i32
    %190 = arith.index_cast %c5_i32 : i32 to index
    %c0_54 = arith.constant 0 : index
    %c0_55 = arith.constant 0 : index
    %191 = vector.load %arg2[%190, %c0_54, %c0_55] : memref<8x8x512xbf16, #tpu.memory_space<vmem>>, vector<1x8x512xbf16>
    %192 = vector.shape_cast %191 : vector<1x8x512xbf16> to vector<8x512xbf16>
    %193 = arith.extf %192 : vector<8x512xbf16> to vector<8x512xf32>
    %194 = arith.truncf %185 : vector<8x128xf32> to vector<8x128xbf16>
    %c0_56 = arith.constant 0 : index
    %c0_57 = arith.constant 0 : index
    %195 = vector.load %arg5[%c0_56, %c0_57] : memref<128x512xbf16, #tpu.memory_space<vmem>>, vector<128x512xbf16>
    %cst_58 = arith.constant dense<0.000000e+00> : vector<8x512xf32>
    %196 = tpu.matmul %194, %195, %cst_58 {dimension_numbers = #tpu.dot_dimension_numbers<[1], [0], [0], [1], [0, 0, 1, 1], [], []>} : vector<8x128xbf16>, vector<128x512xbf16>, vector<8x512xf32> -> vector<8x512xf32>
    %197 = arith.addf %193, %196 : vector<8x512xf32>
    %198 = vector.extract_strided_slice %197 {offsets = [0, 0], sizes = [8, 128], strides = [1, 1]} : vector<8x512xf32> to vector<8x128xf32>
    %199 = arith.negf %198 : vector<8x128xf32>
    %200 = math.exp %199 : vector<8x128xf32>
    %cst_59 = arith.constant 1.000000e+00 : f32
    %201 = vector.broadcast %cst_59 : f32 to vector<8x128xf32>
    %202 = arith.addf %201, %200 : vector<8x128xf32>
    %203 = arith.divf %201, %202 : vector<8x128xf32>
    %204 = vector.extract_strided_slice %197 {offsets = [0, 128], sizes = [8, 128], strides = [1, 1]} : vector<8x512xf32> to vector<8x128xf32>
    %205 = arith.negf %204 : vector<8x128xf32>
    %206 = math.exp %205 : vector<8x128xf32>
    %cst_60 = arith.constant 1.000000e+00 : f32
    %207 = vector.broadcast %cst_60 : f32 to vector<8x128xf32>
    %208 = arith.addf %207, %206 : vector<8x128xf32>
    %209 = arith.divf %207, %208 : vector<8x128xf32>
    %210 = vector.extract_strided_slice %197 {offsets = [0, 256], sizes = [8, 128], strides = [1, 1]} : vector<8x512xf32> to vector<8x128xf32>
    %211 = math.tanh %210 : vector<8x128xf32>
    %212 = vector.extract_strided_slice %197 {offsets = [0, 384], sizes = [8, 128], strides = [1, 1]} : vector<8x512xf32> to vector<8x128xf32>
    %213 = arith.negf %212 : vector<8x128xf32>
    %214 = math.exp %213 : vector<8x128xf32>
    %cst_61 = arith.constant 1.000000e+00 : f32
    %215 = vector.broadcast %cst_61 : f32 to vector<8x128xf32>
    %216 = arith.addf %215, %214 : vector<8x128xf32>
    %217 = arith.divf %215, %216 : vector<8x128xf32>
    %218 = arith.mulf %209, %183 : vector<8x128xf32>
    %219 = arith.mulf %203, %211 : vector<8x128xf32>
    %220 = arith.addf %218, %219 : vector<8x128xf32>
    %221 = math.tanh %220 : vector<8x128xf32>
    %222 = arith.mulf %217, %221 : vector<8x128xf32>
    %223 = arith.index_cast %c5_i32 : i32 to index
    %c0_62 = arith.constant 0 : index
    %c0_63 = arith.constant 0 : index
    %224 = vector.load %arg6[%223, %c0_62, %c0_63] : memref<8x8x128xf32, #tpu.memory_space<vmem>>, vector<1x8x128xf32>
    %225 = vector.shape_cast %224 : vector<1x8x128xf32> to vector<8x128xf32>
    %226 = vector.shape_cast %222 : vector<8x128xf32> to vector<1x8x128xf32>
    tpu.vector_store %arg6[%223, %c0_62, %c0_63], %226 {strides = array<i32>} : memref<8x8x128xf32, #tpu.memory_space<vmem>>, vector<1x8x128xf32>,
    %c6_i32 = arith.constant 6 : i32
    %227 = arith.index_cast %c6_i32 : i32 to index
    %c0_64 = arith.constant 0 : index
    %c0_65 = arith.constant 0 : index
    %228 = vector.load %arg2[%227, %c0_64, %c0_65] : memref<8x8x512xbf16, #tpu.memory_space<vmem>>, vector<1x8x512xbf16>
    %229 = vector.shape_cast %228 : vector<1x8x512xbf16> to vector<8x512xbf16>
    %230 = arith.extf %229 : vector<8x512xbf16> to vector<8x512xf32>
    %231 = arith.truncf %222 : vector<8x128xf32> to vector<8x128xbf16>
    %c0_66 = arith.constant 0 : index
    %c0_67 = arith.constant 0 : index
    %232 = vector.load %arg5[%c0_66, %c0_67] : memref<128x512xbf16, #tpu.memory_space<vmem>>, vector<128x512xbf16>
    %cst_68 = arith.constant dense<0.000000e+00> : vector<8x512xf32>
    %233 = tpu.matmul %231, %232, %cst_68 {dimension_numbers = #tpu.dot_dimension_numbers<[1], [0], [0], [1], [0, 0, 1, 1], [], []>} : vector<8x128xbf16>, vector<128x512xbf16>, vector<8x512xf32> -> vector<8x512xf32>
    %234 = arith.addf %230, %233 : vector<8x512xf32>
    %235 = vector.extract_strided_slice %234 {offsets = [0, 0], sizes = [8, 128], strides = [1, 1]} : vector<8x512xf32> to vector<8x128xf32>
    %236 = arith.negf %235 : vector<8x128xf32>
    %237 = math.exp %236 : vector<8x128xf32>
    %cst_69 = arith.constant 1.000000e+00 : f32
    %238 = vector.broadcast %cst_69 : f32 to vector<8x128xf32>
    %239 = arith.addf %238, %237 : vector<8x128xf32>
    %240 = arith.divf %238, %239 : vector<8x128xf32>
    %241 = vector.extract_strided_slice %234 {offsets = [0, 128], sizes = [8, 128], strides = [1, 1]} : vector<8x512xf32> to vector<8x128xf32>
    %242 = arith.negf %241 : vector<8x128xf32>
    %243 = math.exp %242 : vector<8x128xf32>
    %cst_70 = arith.constant 1.000000e+00 : f32
    %244 = vector.broadcast %cst_70 : f32 to vector<8x128xf32>
    %245 = arith.addf %244, %243 : vector<8x128xf32>
    %246 = arith.divf %244, %245 : vector<8x128xf32>
    %247 = vector.extract_strided_slice %234 {offsets = [0, 256], sizes = [8, 128], strides = [1, 1]} : vector<8x512xf32> to vector<8x128xf32>
    %248 = math.tanh %247 : vector<8x128xf32>
    %249 = vector.extract_strided_slice %234 {offsets = [0, 384], sizes = [8, 128], strides = [1, 1]} : vector<8x512xf32> to vector<8x128xf32>
    %250 = arith.negf %249 : vector<8x128xf32>
    %251 = math.exp %250 : vector<8x128xf32>
    %cst_71 = arith.constant 1.000000e+00 : f32
    %252 = vector.broadcast %cst_71 : f32 to vector<8x128xf32>
    %253 = arith.addf %252, %251 : vector<8x128xf32>
    %254 = arith.divf %252, %253 : vector<8x128xf32>
    %255 = arith.mulf %246, %220 : vector<8x128xf32>
    %256 = arith.mulf %240, %248 : vector<8x128xf32>
    %257 = arith.addf %255, %256 : vector<8x128xf32>
    %258 = math.tanh %257 : vector<8x128xf32>
    %259 = arith.mulf %254, %258 : vector<8x128xf32>
    %260 = arith.index_cast %c6_i32 : i32 to index
    %c0_72 = arith.constant 0 : index
    %c0_73 = arith.constant 0 : index
    %261 = vector.load %arg6[%260, %c0_72, %c0_73] : memref<8x8x128xf32, #tpu.memory_space<vmem>>, vector<1x8x128xf32>
    %262 = vector.shape_cast %261 : vector<1x8x128xf32> to vector<8x128xf32>
    %263 = vector.shape_cast %259 : vector<8x128xf32> to vector<1x8x128xf32>
    tpu.vector_store %arg6[%260, %c0_72, %c0_73], %263 {strides = array<i32>} : memref<8x8x128xf32, #tpu.memory_space<vmem>>, vector<1x8x128xf32>,
    %c7_i32 = arith.constant 7 : i32
    %264 = arith.index_cast %c7_i32 : i32 to index
    %c0_74 = arith.constant 0 : index
    %c0_75 = arith.constant 0 : index
    %265 = vector.load %arg2[%264, %c0_74, %c0_75] : memref<8x8x512xbf16, #tpu.memory_space<vmem>>, vector<1x8x512xbf16>
    %266 = vector.shape_cast %265 : vector<1x8x512xbf16> to vector<8x512xbf16>
    %267 = arith.extf %266 : vector<8x512xbf16> to vector<8x512xf32>
    %268 = arith.truncf %259 : vector<8x128xf32> to vector<8x128xbf16>
    %c0_76 = arith.constant 0 : index
    %c0_77 = arith.constant 0 : index
    %269 = vector.load %arg5[%c0_76, %c0_77] : memref<128x512xbf16, #tpu.memory_space<vmem>>, vector<128x512xbf16>
    %cst_78 = arith.constant dense<0.000000e+00> : vector<8x512xf32>
    %270 = tpu.matmul %268, %269, %cst_78 {dimension_numbers = #tpu.dot_dimension_numbers<[1], [0], [0], [1], [0, 0, 1, 1], [], []>} : vector<8x128xbf16>, vector<128x512xbf16>, vector<8x512xf32> -> vector<8x512xf32>
    %271 = arith.addf %267, %270 : vector<8x512xf32>
    %272 = vector.extract_strided_slice %271 {offsets = [0, 0], sizes = [8, 128], strides = [1, 1]} : vector<8x512xf32> to vector<8x128xf32>
    %273 = arith.negf %272 : vector<8x128xf32>
    %274 = math.exp %273 : vector<8x128xf32>
    %cst_79 = arith.constant 1.000000e+00 : f32
    %275 = vector.broadcast %cst_79 : f32 to vector<8x128xf32>
    %276 = arith.addf %275, %274 : vector<8x128xf32>
    %277 = arith.divf %275, %276 : vector<8x128xf32>
    %278 = vector.extract_strided_slice %271 {offsets = [0, 128], sizes = [8, 128], strides = [1, 1]} : vector<8x512xf32> to vector<8x128xf32>
    %279 = arith.negf %278 : vector<8x128xf32>
    %280 = math.exp %279 : vector<8x128xf32>
    %cst_80 = arith.constant 1.000000e+00 : f32
    %281 = vector.broadcast %cst_80 : f32 to vector<8x128xf32>
    %282 = arith.addf %281, %280 : vector<8x128xf32>
    %283 = arith.divf %281, %282 : vector<8x128xf32>
    %284 = vector.extract_strided_slice %271 {offsets = [0, 256], sizes = [8, 128], strides = [1, 1]} : vector<8x512xf32> to vector<8x128xf32>
    %285 = math.tanh %284 : vector<8x128xf32>
    %286 = vector.extract_strided_slice %271 {offsets = [0, 384], sizes = [8, 128], strides = [1, 1]} : vector<8x512xf32> to vector<8x128xf32>
    %287 = arith.negf %286 : vector<8x128xf32>
    %288 = math.exp %287 : vector<8x128xf32>
    %cst_81 = arith.constant 1.000000e+00 : f32
    %289 = vector.broadcast %cst_81 : f32 to vector<8x128xf32>
    %290 = arith.addf %289, %288 : vector<8x128xf32>
    %291 = arith.divf %289, %290 : vector<8x128xf32>
    %292 = arith.mulf %283, %257 : vector<8x128xf32>
    %293 = arith.mulf %277, %285 : vector<8x128xf32>
    %294 = arith.addf %292, %293 : vector<8x128xf32>
    %295 = math.tanh %294 : vector<8x128xf32>
    %296 = arith.mulf %291, %295 : vector<8x128xf32>
    %297 = arith.index_cast %c7_i32 : i32 to index
    %c0_82 = arith.constant 0 : index
    %c0_83 = arith.constant 0 : index
    %298 = vector.load %arg6[%297, %c0_82, %c0_83] : memref<8x8x128xf32, #tpu.memory_space<vmem>>, vector<1x8x128xf32>
    %299 = vector.shape_cast %298 : vector<1x8x128xf32> to vector<8x128xf32>
    %300 = vector.shape_cast %296 : vector<8x128xf32> to vector<1x8x128xf32>
    tpu.vector_store %arg6[%297, %c0_82, %c0_83], %300 {strides = array<i32>} : memref<8x8x128xf32, #tpu.memory_space<vmem>>, vector<1x8x128xf32>,
    %c8_i32 = arith.constant 8 : i32
    %c0_84 = arith.constant 0 : index
    %c0_85 = arith.constant 0 : index
    %301 = vector.load %arg8[%c0_84, %c0_85] : memref<8x128xf32, #tpu.memory_space<vmem>>, vector<8x128xf32>
    tpu.vector_store %arg8[%c0_84, %c0_85], %296 {strides = array<i32>} : memref<8x128xf32, #tpu.memory_space<vmem>>, vector<8x128xf32>,
    %c0_86 = arith.constant 0 : index
    %c0_87 = arith.constant 0 : index
    %302 = vector.load %arg9[%c0_86, %c0_87] : memref<8x128xf32, #tpu.memory_space<vmem>>, vector<8x128xf32>
    tpu.vector_store %arg9[%c0_86, %c0_87], %294 {strides = array<i32>} : memref<8x128xf32, #tpu.memory_space<vmem>>, vector<8x128xf32>,
    %c0_88 = arith.constant 0 : index
    %c0_89 = arith.constant 0 : index
    %303 = vector.load %arg9[%c0_88, %c0_89] : memref<8x128xf32, #tpu.memory_space<vmem>>, vector<8x128xf32>
    %c0_90 = arith.constant 0 : index
    %c0_91 = arith.constant 0 : index
    %304 = vector.load %arg7[%c0_90, %c0_91] : memref<8x128xf32, #tpu.memory_space<vmem>>, vector<8x128xf32>
    tpu.vector_store %arg7[%c0_90, %c0_91], %303 {strides = array<i32>} : memref<8x128xf32, #tpu.memory_space<vmem>>, vector<8x128xf32>,
    return
  }
  func.func @transform_0(%arg0: i32, %arg1: i32) -> (i32, i32, i32) {
    %c0_i32 = arith.constant 0 : i32
    %c0_i32_0 = arith.constant 0 : i32
    return %arg1, %arg0, %c0_i32 : i32, i32, i32
  }
  func.func @transform_1(%arg0: i32, %arg1: i32) -> (i32, i32) {
    %c0_i32 = arith.constant 0 : i32
    %c0_i32_0 = arith.constant 0 : i32
    return %arg0, %c0_i32 : i32, i32
  }
  func.func @transform_2(%arg0: i32, %arg1: i32) -> (i32, i32) {
    %c0_i32 = arith.constant 0 : i32
    %c0_i32_0 = arith.constant 0 : i32
    return %arg0, %c0_i32 : i32, i32
  }
  func.func @transform_3(%arg0: i32, %arg1: i32) -> (i32, i32) {
    %c0_i32 = arith.constant 0 : i32
    %c0_i32_0 = arith.constant 0 : i32
    %c0_i32_1 = arith.constant 0 : i32
    return %c0_i32, %c0_i32_0 : i32, i32
  }
  func.func @transform_4(%arg0: i32, %arg1: i32) -> (i32, i32, i32) {
    %c0_i32 = arith.constant 0 : i32
    %c0_i32_0 = arith.constant 0 : i32
    return %arg1, %arg0, %c0_i32 : i32, i32, i32
  }
  func.func @transform_5(%arg0: i32, %arg1: i32) -> (i32, i32) {
    %c0_i32 = arith.constant 0 : i32
    %c0_i32_0 = arith.constant 0 : i32
    return %arg0, %c0_i32 : i32, i32
  }
}

</mosaic_0001>

<llo_original>
// kernel: tpu_custom_call.1
$region0: #{tpu_custom_call.1}
  #allocation0 [shape = 'u32[]', space=smem, size = 0x4, offset = 0x4, fixed_abs, tag = 'smem constant byte address 0x4 - core index']
  #allocation1 [shape = 'u32[144,128]{1,0:T(1,128)}', space=vmem, size = 0x12000, scoped, tag = 'internal scratch']
  #allocation2 [shape = 'f32[8,128]{1,0:T(8,128)}', space=vmem, size = 0x1000, scoped, tag = 'scratch operand']
  #allocation3 [shape = 'f32[8,128]{1,0:T(8,128)}', space=vmem, size = 0x1000, scoped, tag = 'scratch operand']
  %s0 = inlined_call_operand.hbm [shape: bf16[8,8,512], index: 0, kind: input, shape index: {}]
  %s1 = inlined_call_operand.hbm [shape: f32[8,128], index: 1, kind: input, shape index: {}]
  %s2 = inlined_call_operand.hbm [shape: f32[8,128], index: 2, kind: input, shape index: {}]
  %s3 = inlined_call_operand.hbm [shape: bf16[128,512], index: 3, kind: input, shape index: {}]
  %s4 = inlined_call_operand.hbm [shape: f32[8,8,128], index: 4, kind: output, shape index: {0}]
  %s5 = inlined_call_operand.hbm [shape: f32[8,128], index: 5, kind: output, shape index: {1}]
  %6 = xla_tuple %s4, %s5
  %s7 = sld [smem:[#allocation0]]
  $region54: #{tpu_custom_call.1} parent=0
    _
  %s9 = ssub.s32 1, %s7
  %s10 = scalar_select 0, %s9, %s7
  $region1: #{tpu_custom_call.1} parent=0
    #allocation4 [shape = 'u8[65536]{0}', space=vmem, size = 0x10000, scoped, tag = 'input window, operand 0, single buffered']
    #allocation5 [shape = 's32[1]{0}', space=sflag, size = 0x4, scoped, tag = 'scoped memory for tpu_custom_call.1']
    #allocation6 [shape = 's32[1]{0}', space=sflag, size = 0x4, scoped, tag = 'scoped memory for tpu_custom_call.1']
    #allocation7 [shape = 'u8[4096]{0}', space=vmem, size = 0x1000, scoped, tag = 'input window, operand 1, single buffered']
    #allocation8 [shape = 's32[1]{0}', space=sflag, size = 0x4, scoped, tag = 'scoped memory for tpu_custom_call.1']
    #allocation9 [shape = 'u8[4096]{0}', space=vmem, size = 0x1000, scoped, tag = 'input window, operand 2, single buffered']
    #allocation10 [shape = 'u8[131072]{0}', space=vmem, size = 0x20000, scoped, tag = 'input window, operand 3, single buffered']
    #allocation11 [shape = 's32[1]{0}', space=sflag, size = 0x4, scoped, tag = 'scoped memory for tpu_custom_call.1']
    #allocation12 [shape = 'u8[32768]{0}', space=vmem, size = 0x8000, scoped, tag = 'output window, operand 0, single buffered']
    #allocation13 [shape = 'u8[4096]{0}', space=vmem, size = 0x1000, scoped, tag = 'output window, operand 1, single buffered']
    #allocation14 [shape = 's32[1]{0}', space=sflag, size = 0x4, scoped, tag = 'scoped memory for tpu_custom_call.1']
    %11 = vsyncpa [#allocation5], 0
    %12 = vsyncpa [#allocation8], 0
    %13 = vsyncpa [#allocation11], 0
    %14 = vsyncpa [#allocation6], 0
    %15 = vsyncpa [#allocation14], 0
    // Predicated region
    $region2: #{tpu_custom_call.1} parent=1 // pred_check
      _
    $region3: #{tpu_custom_call.1} parent=1 // pred_check_branch
      %17 = sbr.rel (0) target = $region5
    $region4: #{tpu_custom_call.1} parent=1 // pred_region
      %s19 = ssub.s32 2048, 2048
      %20 = vsyncadd [#allocation5], %s19
      %s21 = sshll.u32 [#allocation4], 4
      %s22 = int_to_ptr.vmem [resolvable:$true] %s21
      %27 = dma.hbm_to_vmem [thread:$0]  %s0, 2048, %s22, [#allocation5], 256, 256, 16
    $region5: #{tpu_custom_call.1} parent=1 // pred_fallthru
      _
    // Predicated region
    $region6: #{tpu_custom_call.1} parent=1 // pred_check
      _
    $region7: #{tpu_custom_call.1} parent=1 // pred_check_branch
      %29 = sbr.rel (0) target = $region9
    $region8: #{tpu_custom_call.1} parent=1 // pred_region
      %s31 = ssub.s32 128, 128
      %32 = vsyncadd [#allocation8], %s31
      %s34 = sshll.u32 [#allocation7], 4
      %s35 = int_to_ptr.vmem [resolvable:$true] %s34
      %37 = dma.hbm_to_vmem [thread:$0]  %s1, 128, %s35, [#allocation8]
    $region9: #{tpu_custom_call.1} parent=1 // pred_fallthru
      _
    // Predicated region
    $region10: #{tpu_custom_call.1} parent=1 // pred_check
      _
    $region11: #{tpu_custom_call.1} parent=1 // pred_check_branch
      %39 = sbr.rel (0) target = $region13
    $region12: #{tpu_custom_call.1} parent=1 // pred_region
      %s41 = ssub.s32 128, 128
      %42 = vsyncadd [#allocation8], %s41
      %s44 = sshll.u32 [#allocation9], 4
      %s45 = int_to_ptr.vmem [resolvable:$true] %s44
      %47 = dma.hbm_to_vmem [thread:$0]  %s2, 128, %s45, [#allocation8]
    $region13: #{tpu_custom_call.1} parent=1 // pred_fallthru
      _
    // Predicated region
    $region14: #{tpu_custom_call.1} parent=1 // pred_check
      _
    $region15: #{tpu_custom_call.1} parent=1 // pred_check_branch
      %49 = sbr.rel (0) target = $region17
    $region16: #{tpu_custom_call.1} parent=1 // pred_region
      %s51 = ssub.s32 4096, 4096
      %52 = vsyncadd [#allocation11], %s51
      %s53 = sshll.u32 [#allocation10], 4
      %s54 = int_to_ptr.vmem [resolvable:$true] %s53
      %59 = dma.hbm_to_vmem [thread:$0]  %s3, 4096, %s54, [#allocation11], 256, 256, 16
    $region17: #{tpu_custom_call.1} parent=1 // pred_fallthru
      _
    // Predicated region
    $region18: #{tpu_custom_call.1} parent=1 // pred_check
      _
    $region19: #{tpu_custom_call.1} parent=1 // pred_check_branch
      %61 = sbr.rel (0) target = $region21
    $region20: #{tpu_custom_call.1} parent=1 // pred_region
      %62 = dma.done [#allocation5], 2048
    $region21: #{tpu_custom_call.1} parent=1 // pred_fallthru
      _
    // Predicated region
    $region22: #{tpu_custom_call.1} parent=1 // pred_check
      _
    $region23: #{tpu_custom_call.1} parent=1 // pred_check_branch
      %64 = sbr.rel (0) target = $region25
    $region24: #{tpu_custom_call.1} parent=1 // pred_region
      %65 = dma.done [#allocation8], 128
    $region25: #{tpu_custom_call.1} parent=1 // pred_fallthru
      _
    // Predicated region
    $region26: #{tpu_custom_call.1} parent=1 // pred_check
      _
    $region27: #{tpu_custom_call.1} parent=1 // pred_check_branch
      %67 = sbr.rel (0) target = $region29
    $region28: #{tpu_custom_call.1} parent=1 // pred_region
      %68 = dma.done [#allocation8], 128
    $region29: #{tpu_custom_call.1} parent=1 // pred_fallthru
      _
    // Predicated region
    $region30: #{tpu_custom_call.1} parent=1 // pred_check
      _
    $region31: #{tpu_custom_call.1} parent=1 // pred_check_branch
      %70 = sbr.rel (0) target = $region33
    $region32: #{tpu_custom_call.1} parent=1 // pred_region
      %71 = dma.done [#allocation11], 4096
    $region33: #{tpu_custom_call.1} parent=1 // pred_fallthru
      _
    %p73 = scmp.eq.s32.totalorder 0, 0
    // Predicated region
    $region34: #{tpu_custom_call.1} parent=1 // pred_check
      %p74 = pneg %p73
    $region35: #{tpu_custom_call.1} parent=1 // pred_check_branch
      %76 = sbr.rel (%p74) target = $region37
    $region36: #{tpu_custom_call.1} parent=1 // pred_region
      %v77 = vld [vmem:[#allocation7] sm:$0xff]
      %78 = vst [vmem:[#allocation2] sm:$0xff] %v77
      %v79 = vld [vmem:[#allocation9] sm:$0xff]
      %80 = vst [vmem:[#allocation3] sm:$0xff] %v79
    $region37: #{tpu_custom_call.1} parent=1 // pred_fallthru
      _
    %v81 = vld [vmem:[#allocation2] sm:$0xff]
    %v82 = vld [vmem:[#allocation3] sm:$0xff]
    %v83 = vld [vmem:[#allocation4] sm:$0xff]
    %v84 = vld [vmem:[#allocation4 + $0x8] sm:$0xff]
    %v85 = vunpack.c.l.bf16 %v83
    %v86 = vunpack.c.h.bf16 %v83
    %v87 = vunpack.c.l.bf16 %v84
    %v88 = vunpack.c.h.bf16 %v84
    %v89 = vpack.c.bf16 %v81, %v81
    %v90 = vld [vmem:[#allocation10] sm:$0xff]
    %v91 = vld [vmem:[#allocation10 + $0x8] sm:$0xff]
    %v92 = vld [vmem:[#allocation10 + $0x10] sm:$0xff]
    %v93 = vld [vmem:[#allocation10 + $0x18] sm:$0xff]
    %v94 = vld [vmem:[#allocation10 + $0x20] sm:$0xff]
    %v95 = vld [vmem:[#allocation10 + $0x28] sm:$0xff]
    %v96 = vld [vmem:[#allocation10 + $0x30] sm:$0xff]
    %v97 = vld [vmem:[#allocation10 + $0x38] sm:$0xff]
    %v98 = vld [vmem:[#allocation10 + $0x40] sm:$0xff]
    %v99 = vld [vmem:[#allocation10 + $0x48] sm:$0xff]
    %v100 = vld [vmem:[#allocation10 + $0x50] sm:$0xff]
    %v101 = vld [vmem:[#allocation10 + $0x58] sm:$0xff]
    %v102 = vld [vmem:[#allocation10 + $0x60] sm:$0xff]
    %v103 = vld [vmem:[#allocation10 + $0x68] sm:$0xff]
    %v104 = vld [vmem:[#allocation10 + $0x70] sm:$0xff]
    %v105 = vld [vmem:[#allocation10 + $0x78] sm:$0xff]
    %v106 = vld [vmem:[#allocation10 + $0x80] sm:$0xff]
    %v107 = vld [vmem:[#allocation10 + $0x88] sm:$0xff]
    %v108 = vld [vmem:[#allocation10 + $0x90] sm:$0xff]
    %v109 = vld [vmem:[#allocation10 + $0x98] sm:$0xff]
    %v110 = vld [vmem:[#allocation10 + $0xa0] sm:$0xff]
    %v111 = vld [vmem:[#allocation10 + $0xa8] sm:$0xff]
    %v112 = vld [vmem:[#allocation10 + $0xb0] sm:$0xff]
    %v113 = vld [vmem:[#allocation10 + $0xb8] sm:$0xff]
    %v114 = vld [vmem:[#allocation10 + $0xc0] sm:$0xff]
    %v115 = vld [vmem:[#allocation10 + $0xc8] sm:$0xff]
    %v116 = vld [vmem:[#allocation10 + $0xd0] sm:$0xff]
    %v117 = vld [vmem:[#allocation10 + $0xd8] sm:$0xff]
    %v118 = vld [vmem:[#allocation10 + $0xe0] sm:$0xff]
    %v119 = vld [vmem:[#allocation10 + $0xe8] sm:$0xff]
    %v120 = vld [vmem:[#allocation10 + $0xf0] sm:$0xff]
    %v121 = vld [vmem:[#allocation10 + $0xf8] sm:$0xff]
    %v154 = vunpack.c.l.b16 %v90
    %v155 = vunpack.c.h.b16 %v90
    %v156 = vunpack.c.l.b16 %v91
    %v157 = vunpack.c.h.b16 %v91
    %v158 = vunpack.c.l.b16 %v92
    %v159 = vunpack.c.h.b16 %v92
    %v160 = vunpack.c.l.b16 %v93
    %v161 = vunpack.c.h.b16 %v93
    %v162 = vunpack.c.l.b16 %v94
    %v163 = vunpack.c.h.b16 %v94
    %v164 = vunpack.c.l.b16 %v95
    %v165 = vunpack.c.h.b16 %v95
    %v166 = vunpack.c.l.b16 %v96
    %v167 = vunpack.c.h.b16 %v96
    %v168 = vunpack.c.l.b16 %v97
    %v169 = vunpack.c.h.b16 %v97
    %v170 = vunpack.c.l.b16 %v98
    %v171 = vunpack.c.h.b16 %v98
    %v172 = vunpack.c.l.b16 %v99
    %v173 = vunpack.c.h.b16 %v99
    %v174 = vunpack.c.l.b16 %v100
    %v175 = vunpack.c.h.b16 %v100
    %v176 = vunpack.c.l.b16 %v101
    %v177 = vunpack.c.h.b16 %v101
    %v178 = vunpack.c.l.b16 %v102
    %v179 = vunpack.c.h.b16 %v102
    %v180 = vunpack.c.l.b16 %v103
    %v181 = vunpack.c.h.b16 %v103
    %v182 = vunpack.c.l.b16 %v104
    %v183 = vunpack.c.h.b16 %v104
    %v184 = vunpack.c.l.b16 %v105
    %v185 = vunpack.c.h.b16 %v105
    %v186 = vunpack.c.l.b16 %v106
    %v187 = vunpack.c.h.b16 %v106
    %v188 = vunpack.c.l.b16 %v107
    %v189 = vunpack.c.h.b16 %v107
    %v190 = vunpack.c.l.b16 %v108
    %v191 = vunpack.c.h.b16 %v108
    %v192 = vunpack.c.l.b16 %v109
    %v193 = vunpack.c.h.b16 %v109
    %v194 = vunpack.c.l.b16 %v110
    %v195 = vunpack.c.h.b16 %v110
    %v196 = vunpack.c.l.b16 %v111
    %v197 = vunpack.c.h.b16 %v111
    %v198 = vunpack.c.l.b16 %v112
    %v199 = vunpack.c.h.b16 %v112
    %v200 = vunpack.c.l.b16 %v113
    %v201 = vunpack.c.h.b16 %v113
    %v202 = vunpack.c.l.b16 %v114
    %v203 = vunpack.c.h.b16 %v114
    %v204 = vunpack.c.l.b16 %v115
    %v205 = vunpack.c.h.b16 %v115
    %v206 = vunpack.c.l.b16 %v116
    %v207 = vunpack.c.h.b16 %v116
    %v208 = vunpack.c.l.b16 %v117
    %v209 = vunpack.c.h.b16 %v117
    %v210 = vunpack.c.l.b16 %v118
    %v211 = vunpack.c.h.b16 %v118
    %v212 = vunpack.c.l.b16 %v119
    %v213 = vunpack.c.h.b16 %v119
    %v214 = vunpack.c.l.b16 %v120
    %v215 = vunpack.c.h.b16 %v120
    %v216 = vunpack.c.l.b16 %v121
    %v217 = vunpack.c.h.b16 %v121
    %v218 = vpack.c.b16 %v158, %v154
    %v219 = vpack.c.b16 %v159, %v155
    %v220 = vpack.c.b16 %v160, %v156
    %v221 = vpack.c.b16 %v161, %v157
    %v222 = vpack.c.b16 %v166, %v162
    %v223 = vpack.c.b16 %v167, %v163
    %v224 = vpack.c.b16 %v168, %v164
    %v225 = vpack.c.b16 %v169, %v165
    %v226 = vpack.c.b16 %v174, %v170
    %v227 = vpack.c.b16 %v175, %v171
    %v228 = vpack.c.b16 %v176, %v172
    %v229 = vpack.c.b16 %v177, %v173
    %v230 = vpack.c.b16 %v182, %v178
    %v231 = vpack.c.b16 %v183, %v179
    %v232 = vpack.c.b16 %v184, %v180
    %v233 = vpack.c.b16 %v185, %v181
    %v234 = vpack.c.b16 %v190, %v186
    %v235 = vpack.c.b16 %v191, %v187
    %v236 = vpack.c.b16 %v192, %v188
    %v237 = vpack.c.b16 %v193, %v189
    %v238 = vpack.c.b16 %v198, %v194
    %v239 = vpack.c.b16 %v199, %v195
    %v240 = vpack.c.b16 %v200, %v196
    %v241 = vpack.c.b16 %v201, %v197
    %v242 = vpack.c.b16 %v206, %v202
    %v243 = vpack.c.b16 %v207, %v203
    %v244 = vpack.c.b16 %v208, %v204
    %v245 = vpack.c.b16 %v209, %v205
    %v246 = vpack.c.b16 %v214, %v210
    %v247 = vpack.c.b16 %v215, %v211
    %v248 = vpack.c.b16 %v216, %v212
    %v249 = vpack.c.b16 %v217, %v213
    %282 = vmatprep.subr.bf16.mxu0 %v219
    %283 = vmatpush1.bf16.msra.mxu0 %v218
    %284 = vmatprep.subr.bf16.mxu0 %v223
    %285 = vmatpush1.bf16.msra.mxu0 %v222
    %286 = vmatprep.subr.bf16.mxu0 %v227
    %287 = vmatpush1.bf16.msra.mxu0 %v226
    %288 = vmatprep.subr.bf16.mxu0 %v231
    %289 = vmatpush1.bf16.msra.mxu0 %v230
    %290 = vmatprep.subr.bf16.mxu0 %v235
    %291 = vmatpush1.bf16.msra.mxu0 %v234
    %292 = vmatprep.subr.bf16.mxu0 %v239
    %293 = vmatpush1.bf16.msra.mxu0 %v238
    %294 = vmatprep.subr.bf16.mxu0 %v243
    %295 = vmatpush1.bf16.msra.mxu0 %v242
    %296 = vmatprep.subr.bf16.mxu0 %v247
    %297 = vmatpush1.bf16.msra.mxu0 %v246
    %298 = vmatprep.subr.bf16.mxu0 0
    %299 = vmatpush1.bf16.msra.mxu0 0
    %300 = vmatprep.subr.bf16.mxu0 0
    %301 = vmatpush1.bf16.msra.mxu0 0
    %302 = vmatprep.subr.bf16.mxu0 0
    %303 = vmatpush1.bf16.msra.mxu0 0
    %304 = vmatprep.subr.bf16.mxu0 0
    %305 = vmatpush1.bf16.msra.mxu0 0
    %306 = vmatprep.subr.bf16.mxu0 0
    %307 = vmatpush1.bf16.msra.mxu0 0
    %308 = vmatprep.subr.bf16.mxu0 0
    %309 = vmatpush1.bf16.msra.mxu0 0
    %310 = vmatprep.subr.bf16.mxu0 0
    %311 = vmatpush1.bf16.msra.mxu0 0
    %312 = vmatprep.subr.bf16.mxu0 0
    %313 = vmatpush1.bf16.msra.mxu0 0
    %314 = vmatprep.mubr.bf16.mxu0 0
    %315 = vmatmul.mubr.bf16.gmra.mrb[0].mxu0 %v89
    %v316 = vpop.f32.mrb[0].mxu0
    %v317 = vadd.f32 0.0, %v316
    %v318 = vpop.f32.mrb[0].mxu0
    %v319 = vadd.f32 0.0, %v318
    %v320 = vpop.f32.mrb[0].mxu0
    %v321 = vpop.f32.mrb[0].mxu0
    %322 = vdwg.mxu0
    %323 = vmatprep.subr.bf16.mxu0 %v221
    %324 = vmatpush1.bf16.msra.mxu0 %v220
    %325 = vmatprep.subr.bf16.mxu0 %v225
    %326 = vmatpush1.bf16.msra.mxu0 %v224
    %327 = vmatprep.subr.bf16.mxu0 %v229
    %328 = vmatpush1.bf16.msra.mxu0 %v228
    %329 = vmatprep.subr.bf16.mxu0 %v233
    %330 = vmatpush1.bf16.msra.mxu0 %v232
    %331 = vmatprep.subr.bf16.mxu0 %v237
    %332 = vmatpush1.bf16.msra.mxu0 %v236
    %333 = vmatprep.subr.bf16.mxu0 %v241
    %334 = vmatpush1.bf16.msra.mxu0 %v240
    %335 = vmatprep.subr.bf16.mxu0 %v245
    %336 = vmatpush1.bf16.msra.mxu0 %v244
    %337 = vmatprep.subr.bf16.mxu0 %v249
    %338 = vmatpush1.bf16.msra.mxu0 %v248
    %339 = vmatprep.subr.bf16.mxu0 0
    %340 = vmatpush1.bf16.msra.mxu0 0
    %341 = vmatprep.subr.bf16.mxu0 0
    %342 = vmatpush1.bf16.msra.mxu0 0
    %343 = vmatprep.subr.bf16.mxu0 0
    %344 = vmatpush1.bf16.msra.mxu0 0
    %345 = vmatprep.subr.bf16.mxu0 0
    %346 = vmatpush1.bf16.msra.mxu0 0
    %347 = vmatprep.subr.bf16.mxu0 0
    %348 = vmatpush1.bf16.msra.mxu0 0
    %349 = vmatprep.subr.bf16.mxu0 0
    %350 = vmatpush1.bf16.msra.mxu0 0
    %351 = vmatprep.subr.bf16.mxu0 0
    %352 = vmatpush1.bf16.msra.mxu0 0
    %353 = vmatprep.subr.bf16.mxu0 0
    %354 = vmatpush1.bf16.msra.mxu0 0
    %355 = vmatprep.mubr.bf16.mxu0 0
    %356 = vmatmul.mubr.bf16.gmra.mrb[0].mxu0 %v89
    %v357 = vpop.f32.mrb[0].mxu0
    %v358 = vadd.f32 0.0, %v357
    %v359 = vpop.f32.mrb[0].mxu0
    %v360 = vadd.f32 0.0, %v359
    %v361 = vpop.f32.mrb[0].mxu0
    %v362 = vpop.f32.mrb[0].mxu0
    %363 = vdwg.mxu0
    %v364 = vadd.f32 %v85, %v317
    %v365 = vadd.f32 %v86, %v319
    %v366 = vadd.f32 %v87, %v358
    %v367 = vadd.f32 %v88, %v360
    %v368 = vxor.u32 %v364, 2147483648
    %v369 = vmul.f32 %v368, 1.442695
    %v370 = vpow.pop %v369
    %v371 = vadd.f32 %v370, 1.0
    %v372 = vrcp.pop %v371
    %v373 = vmul.f32 1.0, %v372
    %v374 = vxor.u32 %v365, 2147483648
    %v375 = vmul.f32 %v374, 1.442695
    %v376 = vpow.pop %v375
    %v377 = vadd.f32 %v376, 1.0
    %v378 = vrcp.pop %v377
    %v379 = vmul.f32 1.0, %v378
    %v380 = vtanh.pop %v366
    %v381 = vxor.u32 %v367, 2147483648
    %v382 = vmul.f32 %v381, 1.442695
    %v383 = vpow.pop %v382
    %v384 = vadd.f32 %v383, 1.0
    %v385 = vrcp.pop %v384
    %v386 = vmul.f32 1.0, %v385
    %v387 = vmul.f32 %v379, %v82
    %v388 = vmul.f32 %v373, %v380
    %v389 = vadd.f32 %v387, %v388
    %v390 = vtanh.pop %v389
    %v391 = vmul.f32 %v386, %v390
    %392 = vst [vmem:[#allocation12] sm:$0xff] %v391
    %s393 = scalar_lea.vmem [#allocation4], 16
    %v394 = vld [vmem:[%s393] sm:$0xff]
    %v395 = vld [vmem:[%s393 + $0x8] sm:$0xff]
    %v396 = vunpack.c.l.bf16 %v394
    %v397 = vunpack.c.h.bf16 %v394
    %v398 = vunpack.c.l.bf16 %v395
    %v399 = vunpack.c.h.bf16 %v395
    %v400 = vpack.c.bf16 %v391, %v391
    %v401 = vld [vmem:[#allocation10] sm:$0xff]
    %v402 = vld [vmem:[#allocation10 + $0x8] sm:$0xff]
    %v403 = vld [vmem:[#allocation10 + $0x10] sm:$0xff]
    %v404 = vld [vmem:[#allocation10 + $0x18] sm:$0xff]
    %v405 = vld [vmem:[#allocation10 + $0x20] sm:$0xff]
    %v406 = vld [vmem:[#allocation10 + $0x28] sm:$0xff]
    %v407 = vld [vmem:[#allocation10 + $0x30] sm:$0xff]
    %v408 = vld [vmem:[#allocation10 + $0x38] sm:$0xff]
    %v409 = vld [vmem:[#allocation10 + $0x40] sm:$0xff]
    %v410 = vld [vmem:[#allocation10 + $0x48] sm:$0xff]
    %v411 = vld [vmem:[#allocation10 + $0x50] sm:$0xff]
    %v412 = vld [vmem:[#allocation10 + $0x58] sm:$0xff]
    %v413 = vld [vmem:[#allocation10 + $0x60] sm:$0xff]
    %v414 = vld [vmem:[#allocation10 + $0x68] sm:$0xff]
    %v415 = vld [vmem:[#allocation10 + $0x70] sm:$0xff]
    %v416 = vld [vmem:[#allocation10 + $0x78] sm:$0xff]
    %v417 = vld [vmem:[#allocation10 + $0x80] sm:$0xff]
    %v418 = vld [vmem:[#allocation10 + $0x88] sm:$0xff]
    %v419 = vld [vmem:[#allocation10 + $0x90] sm:$0xff]
    %v420 = vld [vmem:[#allocation10 + $0x98] sm:$0xff]
    %v421 = vld [vmem:[#allocation10 + $0xa0] sm:$0xff]
    %v422 = vld [vmem:[#allocation10 + $0xa8] sm:$0xff]
    %v423 = vld [vmem:[#allocation10 + $0xb0] sm:$0xff]
    %v424 = vld [vmem:[#allocation10 + $0xb8] sm:$0xff]
    %v425 = vld [vmem:[#allocation10 + $0xc0] sm:$0xff]
    %v426 = vld [vmem:[#allocation10 + $0xc8] sm:$0xff]
    %v427 = vld [vmem:[#allocation10 + $0xd0] sm:$0xff]
    %v428 = vld [vmem:[#allocation10 + $0xd8] sm:$0xff]
    %v429 = vld [vmem:[#allocation10 + $0xe0] sm:$0xff]
    %v430 = vld [vmem:[#allocation10 + $0xe8] sm:$0xff]
    %v431 = vld [vmem:[#allocation10 + $0xf0] sm:$0xff]
    %v432 = vld [vmem:[#allocation10 + $0xf8] sm:$0xff]
    %v465 = vunpack.c.l.b16 %v401
    %v466 = vunpack.c.h.b16 %v401
    %v467 = vunpack.c.l.b16 %v402
    %v468 = vunpack.c.h.b16 %v402
    %v469 = vunpack.c.l.b16 %v403
    %v470 = vunpack.c.h.b16 %v403
    %v471 = vunpack.c.l.b16 %v404
    %v472 = vunpack.c.h.b16 %v404
    %v473 = vunpack.c.l.b16 %v405
    %v474 = vunpack.c.h.b16 %v405
    %v475 = vunpack.c.l.b16 %v406
    %v476 = vunpack.c.h.b16 %v406
    %v477 = vunpack.c.l.b16 %v407
    %v478 = vunpack.c.h.b16 %v407
    %v479 = vunpack.c.l.b16 %v408
    %v480 = vunpack.c.h.b16 %v408
    %v481 = vunpack.c.l.b16 %v409
    %v482 = vunpack.c.h.b16 %v409
    %v483 = vunpack.c.l.b16 %v410
    %v484 = vunpack.c.h.b16 %v410
    %v485 = vunpack.c.l.b16 %v411
    %v486 = vunpack.c.h.b16 %v411
    %v487 = vunpack.c.l.b16 %v412
    %v488 = vunpack.c.h.b16 %v412
    %v489 = vunpack.c.l.b16 %v413
    %v490 = vunpack.c.h.b16 %v413
    %v491 = vunpack.c.l.b16 %v414
    %v492 = vunpack.c.h.b16 %v414
    %v493 = vunpack.c.l.b16 %v415
    %v494 = vunpack.c.h.b16 %v415
    %v495 = vunpack.c.l.b16 %v416
    %v496 = vunpack.c.h.b16 %v416
    %v497 = vunpack.c.l.b16 %v417
    %v498 = vunpack.c.h.b16 %v417
    %v499 = vunpack.c.l.b16 %v418
    %v500 = vunpack.c.h.b16 %v418
    %v501 = vunpack.c.l.b16 %v419
    %v502 = vunpack.c.h.b16 %v419
    %v503 = vunpack.c.l.b16 %v420
    %v504 = vunpack.c.h.b16 %v420
    %v505 = vunpack.c.l.b16 %v421
    %v506 = vunpack.c.h.b16 %v421
    %v507 = vunpack.c.l.b16 %v422
    %v508 = vunpack.c.h.b16 %v422
    %v509 = vunpack.c.l.b16 %v423
    %v510 = vunpack.c.h.b16 %v423
    %v511 = vunpack.c.l.b16 %v424
    %v512 = vunpack.c.h.b16 %v424
    %v513 = vunpack.c.l.b16 %v425
    %v514 = vunpack.c.h.b16 %v425
    %v515 = vunpack.c.l.b16 %v426
    %v516 = vunpack.c.h.b16 %v426
    %v517 = vunpack.c.l.b16 %v427
    %v518 = vunpack.c.h.b16 %v427
    %v519 = vunpack.c.l.b16 %v428
    %v520 = vunpack.c.h.b16 %v428
    %v521 = vunpack.c.l.b16 %v429
    %v522 = vunpack.c.h.b16 %v429
    %v523 = vunpack.c.l.b16 %v430
    %v524 = vunpack.c.h.b16 %v430
    %v525 = vunpack.c.l.b16 %v431
    %v526 = vunpack.c.h.b16 %v431
    %v527 = vunpack.c.l.b16 %v432
    %v528 = vunpack.c.h.b16 %v432
    %v529 = vpack.c.b16 %v469, %v465
    %v530 = vpack.c.b16 %v470, %v466
    %v531 = vpack.c.b16 %v471, %v467
    %v532 = vpack.c.b16 %v472, %v468
    %v533 = vpack.c.b16 %v477, %v473
    %v534 = vpack.c.b16 %v478, %v474
    %v535 = vpack.c.b16 %v479, %v475
    %v536 = vpack.c.b16 %v480, %v476
    %v537 = vpack.c.b16 %v485, %v481
    %v538 = vpack.c.b16 %v486, %v482
    %v539 = vpack.c.b16 %v487, %v483
    %v540 = vpack.c.b16 %v488, %v484
    %v541 = vpack.c.b16 %v493, %v489
    %v542 = vpack.c.b16 %v494, %v490
    %v543 = vpack.c.b16 %v495, %v491
    %v544 = vpack.c.b16 %v496, %v492
    %v545 = vpack.c.b16 %v501, %v497
    %v546 = vpack.c.b16 %v502, %v498
    %v547 = vpack.c.b16 %v503, %v499
    %v548 = vpack.c.b16 %v504, %v500
    %v549 = vpack.c.b16 %v509, %v505
    %v550 = vpack.c.b16 %v510, %v506
    %v551 = vpack.c.b16 %v511, %v507
    %v552 = vpack.c.b16 %v512, %v508
    %v553 = vpack.c.b16 %v517, %v513
    %v554 = vpack.c.b16 %v518, %v514
    %v555 = vpack.c.b16 %v519, %v515
    %v556 = vpack.c.b16 %v520, %v516
    %v557 = vpack.c.b16 %v525, %v521
    %v558 = vpack.c.b16 %v526, %v522
    %v559 = vpack.c.b16 %v527, %v523
    %v560 = vpack.c.b16 %v528, %v524
    %593 = vmatprep.subr.bf16.mxu0 %v530
    %594 = vmatpush1.bf16.msra.mxu0 %v529
    %595 = vmatprep.subr.bf16.mxu0 %v534
    %596 = vmatpush1.bf16.msra.mxu0 %v533
    %597 = vmatprep.subr.bf16.mxu0 %v538
    %598 = vmatpush1.bf16.msra.mxu0 %v537
    %599 = vmatprep.subr.bf16.mxu0 %v542
    %600 = vmatpush1.bf16.msra.mxu0 %v541
    %601 = vmatprep.subr.bf16.mxu0 %v546
    %602 = vmatpush1.bf16.msra.mxu0 %v545
    %603 = vmatprep.subr.bf16.mxu0 %v550
    %604 = vmatpush1.bf16.msra.mxu0 %v549
    %605 = vmatprep.subr.bf16.mxu0 %v554
    %606 = vmatpush1.bf16.msra.mxu0 %v553
    %607 = vmatprep.subr.bf16.mxu0 %v558
    %608 = vmatpush1.bf16.msra.mxu0 %v557
    %609 = vmatprep.subr.bf16.mxu0 0
    %610 = vmatpush1.bf16.msra.mxu0 0
    %611 = vmatprep.subr.bf16.mxu0 0
    %612 = vmatpush1.bf16.msra.mxu0 0
    %613 = vmatprep.subr.bf16.mxu0 0
    %614 = vmatpush1.bf16.msra.mxu0 0
    %615 = vmatprep.subr.bf16.mxu0 0
    %616 = vmatpush1.bf16.msra.mxu0 0
    %617 = vmatprep.subr.bf16.mxu0 0
    %618 = vmatpush1.bf16.msra.mxu0 0
    %619 = vmatprep.subr.bf16.mxu0 0
    %620 = vmatpush1.bf16.msra.mxu0 0
    %621 = vmatprep.subr.bf16.mxu0 0
    %622 = vmatpush1.bf16.msra.mxu0 0
    %623 = vmatprep.subr.bf16.mxu0 0
    %624 = vmatpush1.bf16.msra.mxu0 0
    %625 = vmatprep.mubr.bf16.mxu0 0
    %626 = vmatmul.mubr.bf16.gmra.mrb[0].mxu0 %v400
    %v627 = vpop.f32.mrb[0].mxu0
    %v628 = vadd.f32 0.0, %v627
    %v629 = vpop.f32.mrb[0].mxu0
    %v630 = vadd.f32 0.0, %v629
    %v631 = vpop.f32.mrb[0].mxu0
    %v632 = vpop.f32.mrb[0].mxu0
    %633 = vdwg.mxu0
    %634 = vmatprep.subr.bf16.mxu0 %v532
    %635 = vmatpush1.bf16.msra.mxu0 %v531
    %636 = vmatprep.subr.bf16.mxu0 %v536
    %637 = vmatpush1.bf16.msra.mxu0 %v535
    %638 = vmatprep.subr.bf16.mxu0 %v540
    %639 = vmatpush1.bf16.msra.mxu0 %v539
    %640 = vmatprep.subr.bf16.mxu0 %v544
    %641 = vmatpush1.bf16.msra.mxu0 %v543
    %642 = vmatprep.subr.bf16.mxu0 %v548
    %643 = vmatpush1.bf16.msra.mxu0 %v547
    %644 = vmatprep.subr.bf16.mxu0 %v552
    %645 = vmatpush1.bf16.msra.mxu0 %v551
    %646 = vmatprep.subr.bf16.mxu0 %v556
    %647 = vmatpush1.bf16.msra.mxu0 %v555
    %648 = vmatprep.subr.bf16.mxu0 %v560
    %649 = vmatpush1.bf16.msra.mxu0 %v559
    %650 = vmatprep.subr.bf16.mxu0 0
    %651 = vmatpush1.bf16.msra.mxu0 0
    %652 = vmatprep.subr.bf16.mxu0 0
    %653 = vmatpush1.bf16.msra.mxu0 0
    %654 = vmatprep.subr.bf16.mxu0 0
    %655 = vmatpush1.bf16.msra.mxu0 0
    %656 = vmatprep.subr.bf16.mxu0 0
    %657 = vmatpush1.bf16.msra.mxu0 0
    %658 = vmatprep.subr.bf16.mxu0 0
    %659 = vmatpush1.bf16.msra.mxu0 0
    %660 = vmatprep.subr.bf16.mxu0 0
    %661 = vmatpush1.bf16.msra.mxu0 0
    %662 = vmatprep.subr.bf16.mxu0 0
    %663 = vmatpush1.bf16.msra.mxu0 0
    %664 = vmatprep.subr.bf16.mxu0 0
    %665 = vmatpush1.bf16.msra.mxu0 0
    %666 = vmatprep.mubr.bf16.mxu0 0
    %667 = vmatmul.mubr.bf16.gmra.mrb[0].mxu0 %v400
    %v668 = vpop.f32.mrb[0].mxu0
    %v669 = vadd.f32 0.0, %v668
    %v670 = vpop.f32.mrb[0].mxu0
    %v671 = vadd.f32 0.0, %v670
    %v672 = vpop.f32.mrb[0].mxu0
    %v673 = vpop.f32.mrb[0].mxu0
    %674 = vdwg.mxu0
    %v675 = vadd.f32 %v396, %v628
    %v676 = vadd.f32 %v397, %v630
    %v677 = vadd.f32 %v398, %v669
    %v678 = vadd.f32 %v399, %v671
    %v679 = vxor.u32 %v675, 2147483648
    %v680 = vmul.f32 %v679, 1.442695
    %v681 = vpow.pop %v680
    %v682 = vadd.f32 %v681, 1.0
    %v683 = vrcp.pop %v682
    %v684 = vmul.f32 1.0, %v683
    %v685 = vxor.u32 %v676, 2147483648
    %v686 = vmul.f32 %v685, 1.442695
    %v687 = vpow.pop %v686
    %v688 = vadd.f32 %v687, 1.0
    %v689 = vrcp.pop %v688
    %v690 = vmul.f32 1.0, %v689
    %v691 = vtanh.pop %v677
    %v692 = vxor.u32 %v678, 2147483648
    %v693 = vmul.f32 %v692, 1.442695
    %v694 = vpow.pop %v693
    %v695 = vadd.f32 %v694, 1.0
    %v696 = vrcp.pop %v695
    %v697 = vmul.f32 1.0, %v696
    %v698 = vmul.f32 %v690, %v389
    %v699 = vmul.f32 %v684, %v691
    %v700 = vadd.f32 %v698, %v699
    %v701 = vtanh.pop %v700
    %v702 = vmul.f32 %v697, %v701
    %s703 = scalar_lea.vmem [#allocation12], 8
    %704 = vst [vmem:[%s703] sm:$0xff] %v702
    %s705 = scalar_lea.vmem [#allocation4], 32
    %v706 = vld [vmem:[%s705] sm:$0xff]
    %v707 = vld [vmem:[%s705 + $0x8] sm:$0xff]
    %v708 = vunpack.c.l.bf16 %v706
    %v709 = vunpack.c.h.bf16 %v706
    %v710 = vunpack.c.l.bf16 %v707
    %v711 = vunpack.c.h.bf16 %v707
    %v712 = vpack.c.bf16 %v702, %v702
    %v713 = vld [vmem:[#allocation10] sm:$0xff]
    %v714 = vld [vmem:[#allocation10 + $0x8] sm:$0xff]
    %v715 = vld [vmem:[#allocation10 + $0x10] sm:$0xff]
    %v716 = vld [vmem:[#allocation10 + $0x18] sm:$0xff]
    %v717 = vld [vmem:[#allocation10 + $0x20] sm:$0xff]
    %v718 = vld [vmem:[#allocation10 + $0x28] sm:$0xff]
    %v719 = vld [vmem:[#allocation10 + $0x30] sm:$0xff]
    %v720 = vld [vmem:[#allocation10 + $0x38] sm:$0xff]
    %v721 = vld [vmem:[#allocation10 + $0x40] sm:$0xff]
    %v722 = vld [vmem:[#allocation10 + $0x48] sm:$0xff]
    %v723 = vld [vmem:[#allocation10 + $0x50] sm:$0xff]
    %v724 = vld [vmem:[#allocation10 + $0x58] sm:$0xff]
    %v725 = vld [vmem:[#allocation10 + $0x60] sm:$0xff]
    %v726 = vld [vmem:[#allocation10 + $0x68] sm:$0xff]
    %v727 = vld [vmem:[#allocation10 + $0x70] sm:$0xff]
    %v728 = vld [vmem:[#allocation10 + $0x78] sm:$0xff]
    %v729 = vld [vmem:[#allocation10 + $0x80] sm:$0xff]
    %v730 = vld [vmem:[#allocation10 + $0x88] sm:$0xff]
    %v731 = vld [vmem:[#allocation10 + $0x90] sm:$0xff]
    %v732 = vld [vmem:[#allocation10 + $0x98] sm:$0xff]
    %v733 = vld [vmem:[#allocation10 + $0xa0] sm:$0xff]
    %v734 = vld [vmem:[#allocation10 + $0xa8] sm:$0xff]
    %v735 = vld [vmem:[#allocation10 + $0xb0] sm:$0xff]
    %v736 = vld [vmem:[#allocation10 + $0xb8] sm:$0xff]
    %v737 = vld [vmem:[#allocation10 + $0xc0] sm:$0xff]
    %v738 = vld [vmem:[#allocation10 + $0xc8] sm:$0xff]
    %v739 = vld [vmem:[#allocation10 + $0xd0] sm:$0xff]
    %v740 = vld [vmem:[#allocation10 + $0xd8] sm:$0xff]
    %v741 = vld [vmem:[#allocation10 + $0xe0] sm:$0xff]
    %v742 = vld [vmem:[#allocation10 + $0xe8] sm:$0xff]
    %v743 = vld [vmem:[#allocation10 + $0xf0] sm:$0xff]
    %v744 = vld [vmem:[#allocation10 + $0xf8] sm:$0xff]
    %v777 = vunpack.c.l.b16 %v713
    %v778 = vunpack.c.h.b16 %v713
    %v779 = vunpack.c.l.b16 %v714
    %v780 = vunpack.c.h.b16 %v714
    %v781 = vunpack.c.l.b16 %v715
    %v782 = vunpack.c.h.b16 %v715
    %v783 = vunpack.c.l.b16 %v716
    %v784 = vunpack.c.h.b16 %v716
    %v785 = vunpack.c.l.b16 %v717
    %v786 = vunpack.c.h.b16 %v717
    %v787 = vunpack.c.l.b16 %v718
    %v788 = vunpack.c.h.b16 %v718
    %v789 = vunpack.c.l.b16 %v719
    %v790 = vunpack.c.h.b16 %v719
    %v791 = vunpack.c.l.b16 %v720
    %v792 = vunpack.c.h.b16 %v720
    %v793 = vunpack.c.l.b16 %v721
    %v794 = vunpack.c.h.b16 %v721
    %v795 = vunpack.c.l.b16 %v722
    %v796 = vunpack.c.h.b16 %v722
    %v797 = vunpack.c.l.b16 %v723
    %v798 = vunpack.c.h.b16 %v723
    %v799 = vunpack.c.l.b16 %v724
    %v800 = vunpack.c.h.b16 %v724
    %v801 = vunpack.c.l.b16 %v725
    %v802 = vunpack.c.h.b16 %v725
    %v803 = vunpack.c.l.b16 %v726
    %v804 = vunpack.c.h.b16 %v726
    %v805 = vunpack.c.l.b16 %v727
    %v806 = vunpack.c.h.b16 %v727
    %v807 = vunpack.c.l.b16 %v728
    %v808 = vunpack.c.h.b16 %v728
    %v809 = vunpack.c.l.b16 %v729
    %v810 = vunpack.c.h.b16 %v729
    %v811 = vunpack.c.l.b16 %v730
    %v812 = vunpack.c.h.b16 %v730
    %v813 = vunpack.c.l.b16 %v731
    %v814 = vunpack.c.h.b16 %v731
    %v815 = vunpack.c.l.b16 %v732
    %v816 = vunpack.c.h.b16 %v732
    %v817 = vunpack.c.l.b16 %v733
    %v818 = vunpack.c.h.b16 %v733
    %v819 = vunpack.c.l.b16 %v734
    %v820 = vunpack.c.h.b16 %v734
    %v821 = vunpack.c.l.b16 %v735
    %v822 = vunpack.c.h.b16 %v735
    %v823 = vunpack.c.l.b16 %v736
    %v824 = vunpack.c.h.b16 %v736
    %v825 = vunpack.c.l.b16 %v737
    %v826 = vunpack.c.h.b16 %v737
    %v827 = vunpack.c.l.b16 %v738
    %v828 = vunpack.c.h.b16 %v738
    %v829 = vunpack.c.l.b16 %v739
    %v830 = vunpack.c.h.b16 %v739
    %v831 = vunpack.c.l.b16 %v740
    %v832 = vunpack.c.h.b16 %v740
    %v833 = vunpack.c.l.b16 %v741
    %v834 = vunpack.c.h.b16 %v741
    %v835 = vunpack.c.l.b16 %v742
    %v836 = vunpack.c.h.b16 %v742
    %v837 = vunpack.c.l.b16 %v743
    %v838 = vunpack.c.h.b16 %v743
    %v839 = vunpack.c.l.b16 %v744
    %v840 = vunpack.c.h.b16 %v744
    %v841 = vpack.c.b16 %v781, %v777
    %v842 = vpack.c.b16 %v782, %v778
    %v843 = vpack.c.b16 %v783, %v779
    %v844 = vpack.c.b16 %v784, %v780
    %v845 = vpack.c.b16 %v789, %v785
    %v846 = vpack.c.b16 %v790, %v786
    %v847 = vpack.c.b16 %v791, %v787
    %v848 = vpack.c.b16 %v792, %v788
    %v849 = vpack.c.b16 %v797, %v793
    %v850 = vpack.c.b16 %v798, %v794
    %v851 = vpack.c.b16 %v799, %v795
    %v852 = vpack.c.b16 %v800, %v796
    %v853 = vpack.c.b16 %v805, %v801
    %v854 = vpack.c.b16 %v806, %v802
    %v855 = vpack.c.b16 %v807, %v803
    %v856 = vpack.c.b16 %v808, %v804
    %v857 = vpack.c.b16 %v813, %v809
    %v858 = vpack.c.b16 %v814, %v810
    %v859 = vpack.c.b16 %v815, %v811
    %v860 = vpack.c.b16 %v816, %v812
    %v861 = vpack.c.b16 %v821, %v817
    %v862 = vpack.c.b16 %v822, %v818
    %v863 = vpack.c.b16 %v823, %v819
    %v864 = vpack.c.b16 %v824, %v820
    %v865 = vpack.c.b16 %v829, %v825
    %v866 = vpack.c.b16 %v830, %v826
    %v867 = vpack.c.b16 %v831, %v827
    %v868 = vpack.c.b16 %v832, %v828
    %v869 = vpack.c.b16 %v837, %v833
    %v870 = vpack.c.b16 %v838, %v834
    %v871 = vpack.c.b16 %v839, %v835
    %v872 = vpack.c.b16 %v840, %v836
    %905 = vmatprep.subr.bf16.mxu0 %v842
    %906 = vmatpush1.bf16.msra.mxu0 %v841
    %907 = vmatprep.subr.bf16.mxu0 %v846
    %908 = vmatpush1.bf16.msra.mxu0 %v845
    %909 = vmatprep.subr.bf16.mxu0 %v850
    %910 = vmatpush1.bf16.msra.mxu0 %v849
    %911 = vmatprep.subr.bf16.mxu0 %v854
    %912 = vmatpush1.bf16.msra.mxu0 %v853
    %913 = vmatprep.subr.bf16.mxu0 %v858
    %914 = vmatpush1.bf16.msra.mxu0 %v857
    %915 = vmatprep.subr.bf16.mxu0 %v862
    %916 = vmatpush1.bf16.msra.mxu0 %v861
    %917 = vmatprep.subr.bf16.mxu0 %v866
    %918 = vmatpush1.bf16.msra.mxu0 %v865
    %919 = vmatprep.subr.bf16.mxu0 %v870
    %920 = vmatpush1.bf16.msra.mxu0 %v869
    %921 = vmatprep.subr.bf16.mxu0 0
    %922 = vmatpush1.bf16.msra.mxu0 0
    %923 = vmatprep.subr.bf16.mxu0 0
    %924 = vmatpush1.bf16.msra.mxu0 0
    %925 = vmatprep.subr.bf16.mxu0 0
    %926 = vmatpush1.bf16.msra.mxu0 0
    %927 = vmatprep.subr.bf16.mxu0 0
    %928 = vmatpush1.bf16.msra.mxu0 0
    %929 = vmatprep.subr.bf16.mxu0 0
    %930 = vmatpush1.bf16.msra.mxu0 0
    %931 = vmatprep.subr.bf16.mxu0 0
    %932 = vmatpush1.bf16.msra.mxu0 0
    %933 = vmatprep.subr.bf16.mxu0 0
    %934 = vmatpush1.bf16.msra.mxu0 0
    %935 = vmatprep.subr.bf16.mxu0 0
    %936 = vmatpush1.bf16.msra.mxu0 0
    %937 = vmatprep.mubr.bf16.mxu0 0
    %938 = vmatmul.mubr.bf16.gmra.mrb[0].mxu0 %v712
    %v939 = vpop.f32.mrb[0].mxu0
    %v940 = vadd.f32 0.0, %v939
    %v941 = vpop.f32.mrb[0].mxu0
    %v942 = vadd.f32 0.0, %v941
    %v943 = vpop.f32.mrb[0].mxu0
    %v944 = vpop.f32.mrb[0].mxu0
    %945 = vdwg.mxu0
    %946 = vmatprep.subr.bf16.mxu0 %v844
    %947 = vmatpush1.bf16.msra.mxu0 %v843
    %948 = vmatprep.subr.bf16.mxu0 %v848
    %949 = vmatpush1.bf16.msra.mxu0 %v847
    %950 = vmatprep.subr.bf16.mxu0 %v852
    %951 = vmatpush1.bf16.msra.mxu0 %v851
    %952 = vmatprep.subr.bf16.mxu0 %v856
    %953 = vmatpush1.bf16.msra.mxu0 %v855
    %954 = vmatprep.subr.bf16.mxu0 %v860
    %955 = vmatpush1.bf16.msra.mxu0 %v859
    %956 = vmatprep.subr.bf16.mxu0 %v864
    %957 = vmatpush1.bf16.msra.mxu0 %v863
    %958 = vmatprep.subr.bf16.mxu0 %v868
    %959 = vmatpush1.bf16.msra.mxu0 %v867
    %960 = vmatprep.subr.bf16.mxu0 %v872
    %961 = vmatpush1.bf16.msra.mxu0 %v871
    %962 = vmatprep.subr.bf16.mxu0 0
    %963 = vmatpush1.bf16.msra.mxu0 0
    %964 = vmatprep.subr.bf16.mxu0 0
    %965 = vmatpush1.bf16.msra.mxu0 0
    %966 = vmatprep.subr.bf16.mxu0 0
    %967 = vmatpush1.bf16.msra.mxu0 0
    %968 = vmatprep.subr.bf16.mxu0 0
    %969 = vmatpush1.bf16.msra.mxu0 0
    %970 = vmatprep.subr.bf16.mxu0 0
    %971 = vmatpush1.bf16.msra.mxu0 0
    %972 = vmatprep.subr.bf16.mxu0 0
    %973 = vmatpush1.bf16.msra.mxu0 0
    %974 = vmatprep.subr.bf16.mxu0 0
    %975 = vmatpush1.bf16.msra.mxu0 0
    %976 = vmatprep.subr.bf16.mxu0 0
    %977 = vmatpush1.bf16.msra.mxu0 0
    %978 = vmatprep.mubr.bf16.mxu0 0
    %979 = vmatmul.mubr.bf16.gmra.mrb[0].mxu0 %v712
    %v980 = vpop.f32.mrb[0].mxu0
    %v981 = vadd.f32 0.0, %v980
    %v982 = vpop.f32.mrb[0].mxu0
    %v983 = vadd.f32 0.0, %v982
    %v984 = vpop.f32.mrb[0].mxu0
    %v985 = vpop.f32.mrb[0].mxu0
    %986 = vdwg.mxu0
    %v987 = vadd.f32 %v708, %v940
    %v988 = vadd.f32 %v709, %v942
    %v989 = vadd.f32 %v710, %v981
    %v990 = vadd.f32 %v711, %v983
    %v991 = vxor.u32 %v987, 2147483648
    %v992 = vmul.f32 %v991, 1.442695
    %v993 = vpow.pop %v992
    %v994 = vadd.f32 %v993, 1.0
    %v995 = vrcp.pop %v994
    %v996 = vmul.f32 1.0, %v995
    %v997 = vxor.u32 %v988, 2147483648
    %v998 = vmul.f32 %v997, 1.442695
    %v999 = vpow.pop %v998
    %v1000 = vadd.f32 %v999, 1.0
    %v1001 = vrcp.pop %v1000
    %v1002 = vmul.f32 1.0, %v1001
    %v1003 = vtanh.pop %v989
    %v1004 = vxor.u32 %v990, 2147483648
    %v1005 = vmul.f32 %v1004, 1.442695
    %v1006 = vpow.pop %v1005
    %v1007 = vadd.f32 %v1006, 1.0
    %v1008 = vrcp.pop %v1007
    %v1009 = vmul.f32 1.0, %v1008
    %v1010 = vmul.f32 %v1002, %v700
    %v1011 = vmul.f32 %v996, %v1003
    %v1012 = vadd.f32 %v1010, %v1011
    %v1013 = vtanh.pop %v1012
    %v1014 = vmul.f32 %v1009, %v1013
    %s1015 = scalar_lea.vmem [#allocation12], 16
    %1016 = vst [vmem:[%s1015] sm:$0xff] %v1014
    %s1017 = scalar_lea.vmem [#allocation4], 48
    %v1018 = vld [vmem:[%s1017] sm:$0xff]
    %v1019 = vld [vmem:[%s1017 + $0x8] sm:$0xff]
    %v1020 = vunpack.c.l.bf16 %v1018
    %v1021 = vunpack.c.h.bf16 %v1018
    %v1022 = vunpack.c.l.bf16 %v1019
    %v1023 = vunpack.c.h.bf16 %v1019
    %v1024 = vpack.c.bf16 %v1014, %v1014
    %v1025 = vld [vmem:[#allocation10] sm:$0xff]
    %v1026 = vld [vmem:[#allocation10 + $0x8] sm:$0xff]
    %v1027 = vld [vmem:[#allocation10 + $0x10] sm:$0xff]
    %v1028 = vld [vmem:[#allocation10 + $0x18] sm:$0xff]
    %v1029 = vld [vmem:[#allocation10 + $0x20] sm:$0xff]
    %v1030 = vld [vmem:[#allocation10 + $0x28] sm:$0xff]
    %v1031 = vld [vmem:[#allocation10 + $0x30] sm:$0xff]
    %v1032 = vld [vmem:[#allocation10 + $0x38] sm:$0xff]
    %v1033 = vld [vmem:[#allocation10 + $0x40] sm:$0xff]
    %v1034 = vld [vmem:[#allocation10 + $0x48] sm:$0xff]
    %v1035 = vld [vmem:[#allocation10 + $0x50] sm:$0xff]
    %v1036 = vld [vmem:[#allocation10 + $0x58] sm:$0xff]
    %v1037 = vld [vmem:[#allocation10 + $0x60] sm:$0xff]
    %v1038 = vld [vmem:[#allocation10 + $0x68] sm:$0xff]
    %v1039 = vld [vmem:[#allocation10 + $0x70] sm:$0xff]
    %v1040 = vld [vmem:[#allocation10 + $0x78] sm:$0xff]
    %v1041 = vld [vmem:[#allocation10 + $0x80] sm:$0xff]
    %v1042 = vld [vmem:[#allocation10 + $0x88] sm:$0xff]
    %v1043 = vld [vmem:[#allocation10 + $0x90] sm:$0xff]
    %v1044 = vld [vmem:[#allocation10 + $0x98] sm:$0xff]
    %v1045 = vld [vmem:[#allocation10 + $0xa0] sm:$0xff]
    %v1046 = vld [vmem:[#allocation10 + $0xa8] sm:$0xff]
    %v1047 = vld [vmem:[#allocation10 + $0xb0] sm:$0xff]
    %v1048 = vld [vmem:[#allocation10 + $0xb8] sm:$0xff]
    %v1049 = vld [vmem:[#allocation10 + $0xc0] sm:$0xff]
    %v1050 = vld [vmem:[#allocation10 + $0xc8] sm:$0xff]
    %v1051 = vld [vmem:[#allocation10 + $0xd0] sm:$0xff]
    %v1052 = vld [vmem:[#allocation10 + $0xd8] sm:$0xff]
    %v1053 = vld [vmem:[#allocation10 + $0xe0] sm:$0xff]
    %v1054 = vld [vmem:[#allocation10 + $0xe8] sm:$0xff]
    %v1055 = vld [vmem:[#allocation10 + $0xf0] sm:$0xff]
    %v1056 = vld [vmem:[#allocation10 + $0xf8] sm:$0xff]
    %v1089 = vunpack.c.l.b16 %v1025
    %v1090 = vunpack.c.h.b16 %v1025
    %v1091 = vunpack.c.l.b16 %v1026
    %v1092 = vunpack.c.h.b16 %v1026
    %v1093 = vunpack.c.l.b16 %v1027
    %v1094 = vunpack.c.h.b16 %v1027
    %v1095 = vunpack.c.l.b16 %v1028
    %v1096 = vunpack.c.h.b16 %v1028
    %v1097 = vunpack.c.l.b16 %v1029
    %v1098 = vunpack.c.h.b16 %v1029
    %v1099 = vunpack.c.l.b16 %v1030
    %v1100 = vunpack.c.h.b16 %v1030
    %v1101 = vunpack.c.l.b16 %v1031
    %v1102 = vunpack.c.h.b16 %v1031
    %v1103 = vunpack.c.l.b16 %v1032
    %v1104 = vunpack.c.h.b16 %v1032
    %v1105 = vunpack.c.l.b16 %v1033
    %v1106 = vunpack.c.h.b16 %v1033
    %v1107 = vunpack.c.l.b16 %v1034
    %v1108 = vunpack.c.h.b16 %v1034
    %v1109 = vunpack.c.l.b16 %v1035
    %v1110 = vunpack.c.h.b16 %v1035
    %v1111 = vunpack.c.l.b16 %v1036
    %v1112 = vunpack.c.h.b16 %v1036
    %v1113 = vunpack.c.l.b16 %v1037
    %v1114 = vunpack.c.h.b16 %v1037
    %v1115 = vunpack.c.l.b16 %v1038
    %v1116 = vunpack.c.h.b16 %v1038
    %v1117 = vunpack.c.l.b16 %v1039
    %v1118 = vunpack.c.h.b16 %v1039
    %v1119 = vunpack.c.l.b16 %v1040
    %v1120 = vunpack.c.h.b16 %v1040
    %v1121 = vunpack.c.l.b16 %v1041
    %v1122 = vunpack.c.h.b16 %v1041
    %v1123 = vunpack.c.l.b16 %v1042
    %v1124 = vunpack.c.h.b16 %v1042
    %v1125 = vunpack.c.l.b16 %v1043
    %v1126 = vunpack.c.h.b16 %v1043
    %v1127 = vunpack.c.l.b16 %v1044
    %v1128 = vunpack.c.h.b16 %v1044
    %v1129 = vunpack.c.l.b16 %v1045
    %v1130 = vunpack.c.h.b16 %v1045
    %v1131 = vunpack.c.l.b16 %v1046
    %v1132 = vunpack.c.h.b16 %v1046
    %v1133 = vunpack.c.l.b16 %v1047
    %v1134 = vunpack.c.h.b16 %v1047
    %v1135 = vunpack.c.l.b16 %v1048
    %v1136 = vunpack.c.h.b16 %v1048
    %v1137 = vunpack.c.l.b16 %v1049
    %v1138 = vunpack.c.h.b16 %v1049
    %v1139 = vunpack.c.l.b16 %v1050
    %v1140 = vunpack.c.h.b16 %v1050
    %v1141 = vunpack.c.l.b16 %v1051
    %v1142 = vunpack.c.h.b16 %v1051
    %v1143 = vunpack.c.l.b16 %v1052
    %v1144 = vunpack.c.h.b16 %v1052
    %v1145 = vunpack.c.l.b16 %v1053
    %v1146 = vunpack.c.h.b16 %v1053
    %v1147 = vunpack.c.l.b16 %v1054
    %v1148 = vunpack.c.h.b16 %v1054
    %v1149 = vunpack.c.l.b16 %v1055
    %v1150 = vunpack.c.h.b16 %v1055
    %v1151 = vunpack.c.l.b16 %v1056
    %v1152 = vunpack.c.h.b16 %v1056
    %v1153 = vpack.c.b16 %v1093, %v1089
    %v1154 = vpack.c.b16 %v1094, %v1090
    %v1155 = vpack.c.b16 %v1095, %v1091
    %v1156 = vpack.c.b16 %v1096, %v1092
    %v1157 = vpack.c.b16 %v1101, %v1097
    %v1158 = vpack.c.b16 %v1102, %v1098
    %v1159 = vpack.c.b16 %v1103, %v1099
    %v1160 = vpack.c.b16 %v1104, %v1100
    %v1161 = vpack.c.b16 %v1109, %v1105
    %v1162 = vpack.c.b16 %v1110, %v1106
    %v1163 = vpack.c.b16 %v1111, %v1107
    %v1164 = vpack.c.b16 %v1112, %v1108
    %v1165 = vpack.c.b16 %v1117, %v1113
    %v1166 = vpack.c.b16 %v1118, %v1114
    %v1167 = vpack.c.b16 %v1119, %v1115
    %v1168 = vpack.c.b16 %v1120, %v1116
    %v1169 = vpack.c.b16 %v1125, %v1121
    %v1170 = vpack.c.b16 %v1126, %v1122
    %v1171 = vpack.c.b16 %v1127, %v1123
    %v1172 = vpack.c.b16 %v1128, %v1124
    %v1173 = vpack.c.b16 %v1133, %v1129
    %v1174 = vpack.c.b16 %v1134, %v1130
    %v1175 = vpack.c.b16 %v1135, %v1131
    %v1176 = vpack.c.b16 %v1136, %v1132
    %v1177 = vpack.c.b16 %v1141, %v1137
    %v1178 = vpack.c.b16 %v1142, %v1138
    %v1179 = vpack.c.b16 %v1143, %v1139
    %v1180 = vpack.c.b16 %v1144, %v1140
    %v1181 = vpack.c.b16 %v1149, %v1145
    %v1182 = vpack.c.b16 %v1150, %v1146
    %v1183 = vpack.c.b16 %v1151, %v1147
    %v1184 = vpack.c.b16 %v1152, %v1148
    %1217 = vmatprep.subr.bf16.mxu0 %v1154
    %1218 = vmatpush1.bf16.msra.mxu0 %v1153
    %1219 = vmatprep.subr.bf16.mxu0 %v1158
    %1220 = vmatpush1.bf16.msra.mxu0 %v1157
    %1221 = vmatprep.subr.bf16.mxu0 %v1162
    %1222 = vmatpush1.bf16.msra.mxu0 %v1161
    %1223 = vmatprep.subr.bf16.mxu0 %v1166
    %1224 = vmatpush1.bf16.msra.mxu0 %v1165
    %1225 = vmatprep.subr.bf16.mxu0 %v1170
    %1226 = vmatpush1.bf16.msra.mxu0 %v1169
    %1227 = vmatprep.subr.bf16.mxu0 %v1174
    %1228 = vmatpush1.bf16.msra.mxu0 %v1173
    %1229 = vmatprep.subr.bf16.mxu0 %v1178
    %1230 = vmatpush1.bf16.msra.mxu0 %v1177
    %1231 = vmatprep.subr.bf16.mxu0 %v1182
    %1232 = vmatpush1.bf16.msra.mxu0 %v1181
    %1233 = vmatprep.subr.bf16.mxu0 0
    %1234 = vmatpush1.bf16.msra.mxu0 0
    %1235 = vmatprep.subr.bf16.mxu0 0
    %1236 = vmatpush1.bf16.msra.mxu0 0
    %1237 = vmatprep.subr.bf16.mxu0 0
    %1238 = vmatpush1.bf16.msra.mxu0 0
    %1239 = vmatprep.subr.bf16.mxu0 0
    %1240 = vmatpush1.bf16.msra.mxu0 0
    %1241 = vmatprep.subr.bf16.mxu0 0
    %1242 = vmatpush1.bf16.msra.mxu0 0
    %1243 = vmatprep.subr.bf16.mxu0 0
    %1244 = vmatpush1.bf16.msra.mxu0 0
    %1245 = vmatprep.subr.bf16.mxu0 0
    %1246 = vmatpush1.bf16.msra.mxu0 0
    %1247 = vmatprep.subr.bf16.mxu0 0
    %1248 = vmatpush1.bf16.msra.mxu0 0
    %1249 = vmatprep.mubr.bf16.mxu0 0
    %1250 = vmatmul.mubr.bf16.gmra.mrb[0].mxu0 %v1024
    %v1251 = vpop.f32.mrb[0].mxu0
    %v1252 = vadd.f32 0.0, %v1251
    %v1253 = vpop.f32.mrb[0].mxu0
    %v1254 = vadd.f32 0.0, %v1253
    %v1255 = vpop.f32.mrb[0].mxu0
    %v1256 = vpop.f32.mrb[0].mxu0
    %1257 = vdwg.mxu0
    %1258 = vmatprep.subr.bf16.mxu0 %v1156
    %1259 = vmatpush1.bf16.msra.mxu0 %v1155
    %1260 = vmatprep.subr.bf16.mxu0 %v1160
    %1261 = vmatpush1.bf16.msra.mxu0 %v1159
    %1262 = vmatprep.subr.bf16.mxu0 %v1164
    %1263 = vmatpush1.bf16.msra.mxu0 %v1163
    %1264 = vmatprep.subr.bf16.mxu0 %v1168
    %1265 = vmatpush1.bf16.msra.mxu0 %v1167
    %1266 = vmatprep.subr.bf16.mxu0 %v1172
    %1267 = vmatpush1.bf16.msra.mxu0 %v1171
    %1268 = vmatprep.subr.bf16.mxu0 %v1176
    %1269 = vmatpush1.bf16.msra.mxu0 %v1175
    %1270 = vmatprep.subr.bf16.mxu0 %v1180
    %1271 = vmatpush1.bf16.msra.mxu0 %v1179
    %1272 = vmatprep.subr.bf16.mxu0 %v1184
    %1273 = vmatpush1.bf16.msra.mxu0 %v1183
    %1274 = vmatprep.subr.bf16.mxu0 0
    %1275 = vmatpush1.bf16.msra.mxu0 0
    %1276 = vmatprep.subr.bf16.mxu0 0
    %1277 = vmatpush1.bf16.msra.mxu0 0
    %1278 = vmatprep.subr.bf16.mxu0 0
    %1279 = vmatpush1.bf16.msra.mxu0 0
    %1280 = vmatprep.subr.bf16.mxu0 0
    %1281 = vmatpush1.bf16.msra.mxu0 0
    %1282 = vmatprep.subr.bf16.mxu0 0
    %1283 = vmatpush1.bf16.msra.mxu0 0
    %1284 = vmatprep.subr.bf16.mxu0 0
    %1285 = vmatpush1.bf16.msra.mxu0 0
    %1286 = vmatprep.subr.bf16.mxu0 0
    %1287 = vmatpush1.bf16.msra.mxu0 0
    %1288 = vmatprep.subr.bf16.mxu0 0
    %1289 = vmatpush1.bf16.msra.mxu0 0
    %1290 = vmatprep.mubr.bf16.mxu0 0
    %1291 = vmatmul.mubr.bf16.gmra.mrb[0].mxu0 %v1024
    %v1292 = vpop.f32.mrb[0].mxu0
    %v1293 = vadd.f32 0.0, %v1292
    %v1294 = vpop.f32.mrb[0].mxu0
    %v1295 = vadd.f32 0.0, %v1294
    %v1296 = vpop.f32.mrb[0].mxu0
    %v1297 = vpop.f32.mrb[0].mxu0
    %1298 = vdwg.mxu0
    %v1299 = vadd.f32 %v1020, %v1252
    %v1300 = vadd.f32 %v1021, %v1254
    %v1301 = vadd.f32 %v1022, %v1293
    %v1302 = vadd.f32 %v1023, %v1295
    %v1303 = vxor.u32 %v1299, 2147483648
    %v1304 = vmul.f32 %v1303, 1.442695
    %v1305 = vpow.pop %v1304
    %v1306 = vadd.f32 %v1305, 1.0
    %v1307 = vrcp.pop %v1306
    %v1308 = vmul.f32 1.0, %v1307
    %v1309 = vxor.u32 %v1300, 2147483648
    %v1310 = vmul.f32 %v1309, 1.442695
    %v1311 = vpow.pop %v1310
    %v1312 = vadd.f32 %v1311, 1.0
    %v1313 = vrcp.pop %v1312
    %v1314 = vmul.f32 1.0, %v1313
    %v1315 = vtanh.pop %v1301
    %v1316 = vxor.u32 %v1302, 2147483648
    %v1317 = vmul.f32 %v1316, 1.442695
    %v1318 = vpow.pop %v1317
    %v1319 = vadd.f32 %v1318, 1.0
    %v1320 = vrcp.pop %v1319
    %v1321 = vmul.f32 1.0, %v1320
    %v1322 = vmul.f32 %v1314, %v1012
    %v1323 = vmul.f32 %v1308, %v1315
    %v1324 = vadd.f32 %v1322, %v1323
    %v1325 = vtanh.pop %v1324
    %v1326 = vmul.f32 %v1321, %v1325
    %s1327 = scalar_lea.vmem [#allocation12], 24
    %1328 = vst [vmem:[%s1327] sm:$0xff] %v1326
    %s1329 = scalar_lea.vmem [#allocation4], 64
    %v1330 = vld [vmem:[%s1329] sm:$0xff]
    %v1331 = vld [vmem:[%s1329 + $0x8] sm:$0xff]
    %v1332 = vunpack.c.l.bf16 %v1330
    %v1333 = vunpack.c.h.bf16 %v1330
    %v1334 = vunpack.c.l.bf16 %v1331
    %v1335 = vunpack.c.h.bf16 %v1331
    %v1336 = vpack.c.bf16 %v1326, %v1326
    %v1337 = vld [vmem:[#allocation10] sm:$0xff]
    %v1338 = vld [vmem:[#allocation10 + $0x8] sm:$0xff]
    %v1339 = vld [vmem:[#allocation10 + $0x10] sm:$0xff]
    %v1340 = vld [vmem:[#allocation10 + $0x18] sm:$0xff]
    %v1341 = vld [vmem:[#allocation10 + $0x20] sm:$0xff]
    %v1342 = vld [vmem:[#allocation10 + $0x28] sm:$0xff]
    %v1343 = vld [vmem:[#allocation10 + $0x30] sm:$0xff]
    %v1344 = vld [vmem:[#allocation10 + $0x38] sm:$0xff]
    %v1345 = vld [vmem:[#allocation10 + $0x40] sm:$0xff]
    %v1346 = vld [vmem:[#allocation10 + $0x48] sm:$0xff]
    %v1347 = vld [vmem:[#allocation10 + $0x50] sm:$0xff]
    %v1348 = vld [vmem:[#allocation10 + $0x58] sm:$0xff]
    %v1349 = vld [vmem:[#allocation10 + $0x60] sm:$0xff]
    %v1350 = vld [vmem:[#allocation10 + $0x68] sm:$0xff]
    %v1351 = vld [vmem:[#allocation10 + $0x70] sm:$0xff]
    %v1352 = vld [vmem:[#allocation10 + $0x78] sm:$0xff]
    %v1353 = vld [vmem:[#allocation10 + $0x80] sm:$0xff]
    %v1354 = vld [vmem:[#allocation10 + $0x88] sm:$0xff]
    %v1355 = vld [vmem:[#allocation10 + $0x90] sm:$0xff]
    %v1356 = vld [vmem:[#allocation10 + $0x98] sm:$0xff]
    %v1357 = vld [vmem:[#allocation10 + $0xa0] sm:$0xff]
    %v1358 = vld [vmem:[#allocation10 + $0xa8] sm:$0xff]
    %v1359 = vld [vmem:[#allocation10 + $0xb0] sm:$0xff]
    %v1360 = vld [vmem:[#allocation10 + $0xb8] sm:$0xff]
    %v1361 = vld [vmem:[#allocation10 + $0xc0] sm:$0xff]
    %v1362 = vld [vmem:[#allocation10 + $0xc8] sm:$0xff]
    %v1363 = vld [vmem:[#allocation10 + $0xd0] sm:$0xff]
    %v1364 = vld [vmem:[#allocation10 + $0xd8] sm:$0xff]
    %v1365 = vld [vmem:[#allocation10 + $0xe0] sm:$0xff]
    %v1366 = vld [vmem:[#allocation10 + $0xe8] sm:$0xff]
    %v1367 = vld [vmem:[#allocation10 + $0xf0] sm:$0xff]
    %v1368 = vld [vmem:[#allocation10 + $0xf8] sm:$0xff]
    %v1401 = vunpack.c.l.b16 %v1337
    %v1402 = vunpack.c.h.b16 %v1337
    %v1403 = vunpack.c.l.b16 %v1338
    %v1404 = vunpack.c.h.b16 %v1338
    %v1405 = vunpack.c.l.b16 %v1339
    %v1406 = vunpack.c.h.b16 %v1339
    %v1407 = vunpack.c.l.b16 %v1340
    %v1408 = vunpack.c.h.b16 %v1340
    %v1409 = vunpack.c.l.b16 %v1341
    %v1410 = vunpack.c.h.b16 %v1341
    %v1411 = vunpack.c.l.b16 %v1342
    %v1412 = vunpack.c.h.b16 %v1342
    %v1413 = vunpack.c.l.b16 %v1343
    %v1414 = vunpack.c.h.b16 %v1343
    %v1415 = vunpack.c.l.b16 %v1344
    %v1416 = vunpack.c.h.b16 %v1344
    %v1417 = vunpack.c.l.b16 %v1345
    %v1418 = vunpack.c.h.b16 %v1345
    %v1419 = vunpack.c.l.b16 %v1346
    %v1420 = vunpack.c.h.b16 %v1346
    %v1421 = vunpack.c.l.b16 %v1347
    %v1422 = vunpack.c.h.b16 %v1347
    %v1423 = vunpack.c.l.b16 %v1348
    %v1424 = vunpack.c.h.b16 %v1348
    %v1425 = vunpack.c.l.b16 %v1349
    %v1426 = vunpack.c.h.b16 %v1349
    %v1427 = vunpack.c.l.b16 %v1350
    %v1428 = vunpack.c.h.b16 %v1350
    %v1429 = vunpack.c.l.b16 %v1351
    %v1430 = vunpack.c.h.b16 %v1351
    %v1431 = vunpack.c.l.b16 %v1352
    %v1432 = vunpack.c.h.b16 %v1352
    %v1433 = vunpack.c.l.b16 %v1353
    %v1434 = vunpack.c.h.b16 %v1353
    %v1435 = vunpack.c.l.b16 %v1354
    %v1436 = vunpack.c.h.b16 %v1354
    %v1437 = vunpack.c.l.b16 %v1355
    %v1438 = vunpack.c.h.b16 %v1355
    %v1439 = vunpack.c.l.b16 %v1356
    %v1440 = vunpack.c.h.b16 %v1356
    %v1441 = vunpack.c.l.b16 %v1357
    %v1442 = vunpack.c.h.b16 %v1357
    %v1443 = vunpack.c.l.b16 %v1358
    %v1444 = vunpack.c.h.b16 %v1358
    %v1445 = vunpack.c.l.b16 %v1359
    %v1446 = vunpack.c.h.b16 %v1359
    %v1447 = vunpack.c.l.b16 %v1360
    %v1448 = vunpack.c.h.b16 %v1360
    %v1449 = vunpack.c.l.b16 %v1361
    %v1450 = vunpack.c.h.b16 %v1361
    %v1451 = vunpack.c.l.b16 %v1362
    %v1452 = vunpack.c.h.b16 %v1362
    %v1453 = vunpack.c.l.b16 %v1363
    %v1454 = vunpack.c.h.b16 %v1363
    %v1455 = vunpack.c.l.b16 %v1364
    %v1456 = vunpack.c.h.b16 %v1364
    %v1457 = vunpack.c.l.b16 %v1365
    %v1458 = vunpack.c.h.b16 %v1365
    %v1459 = vunpack.c.l.b16 %v1366
    %v1460 = vunpack.c.h.b16 %v1366
    %v1461 = vunpack.c.l.b16 %v1367
    %v1462 = vunpack.c.h.b16 %v1367
    %v1463 = vunpack.c.l.b16 %v1368
    %v1464 = vunpack.c.h.b16 %v1368
    %v1465 = vpack.c.b16 %v1405, %v1401
    %v1466 = vpack.c.b16 %v1406, %v1402
    %v1467 = vpack.c.b16 %v1407, %v1403
    %v1468 = vpack.c.b16 %v1408, %v1404
    %v1469 = vpack.c.b16 %v1413, %v1409
    %v1470 = vpack.c.b16 %v1414, %v1410
    %v1471 = vpack.c.b16 %v1415, %v1411
    %v1472 = vpack.c.b16 %v1416, %v1412
    %v1473 = vpack.c.b16 %v1421, %v1417
    %v1474 = vpack.c.b16 %v1422, %v1418
    %v1475 = vpack.c.b16 %v1423, %v1419
    %v1476 = vpack.c.b16 %v1424, %v1420
    %v1477 = vpack.c.b16 %v1429, %v1425
    %v1478 = vpack.c.b16 %v1430, %v1426
    %v1479 = vpack.c.b16 %v1431, %v1427
    %v1480 = vpack.c.b16 %v1432, %v1428
    %v1481 = vpack.c.b16 %v1437, %v1433
    %v1482 = vpack.c.b16 %v1438, %v1434
    %v1483 = vpack.c.b16 %v1439, %v1435
    %v1484 = vpack.c.b16 %v1440, %v1436
    %v1485 = vpack.c.b16 %v1445, %v1441
    %v1486 = vpack.c.b16 %v1446, %v1442
    %v1487 = vpack.c.b16 %v1447, %v1443
    %v1488 = vpack.c.b16 %v1448, %v1444
    %v1489 = vpack.c.b16 %v1453, %v1449
    %v1490 = vpack.c.b16 %v1454, %v1450
    %v1491 = vpack.c.b16 %v1455, %v1451
    %v1492 = vpack.c.b16 %v1456, %v1452
    %v1493 = vpack.c.b16 %v1461, %v1457
    %v1494 = vpack.c.b16 %v1462, %v1458
    %v1495 = vpack.c.b16 %v1463, %v1459
    %v1496 = vpack.c.b16 %v1464, %v1460
    %1529 = vmatprep.subr.bf16.mxu0 %v1466
    %1530 = vmatpush1.bf16.msra.mxu0 %v1465
    %1531 = vmatprep.subr.bf16.mxu0 %v1470
    %1532 = vmatpush1.bf16.msra.mxu0 %v1469
    %1533 = vmatprep.subr.bf16.mxu0 %v1474
    %1534 = vmatpush1.bf16.msra.mxu0 %v1473
    %1535 = vmatprep.subr.bf16.mxu0 %v1478
    %1536 = vmatpush1.bf16.msra.mxu0 %v1477
    %1537 = vmatprep.subr.bf16.mxu0 %v1482
    %1538 = vmatpush1.bf16.msra.mxu0 %v1481
    %1539 = vmatprep.subr.bf16.mxu0 %v1486
    %1540 = vmatpush1.bf16.msra.mxu0 %v1485
    %1541 = vmatprep.subr.bf16.mxu0 %v1490
    %1542 = vmatpush1.bf16.msra.mxu0 %v1489
    %1543 = vmatprep.subr.bf16.mxu0 %v1494
    %1544 = vmatpush1.bf16.msra.mxu0 %v1493
    %1545 = vmatprep.subr.bf16.mxu0 0
    %1546 = vmatpush1.bf16.msra.mxu0 0
    %1547 = vmatprep.subr.bf16.mxu0 0
    %1548 = vmatpush1.bf16.msra.mxu0 0
    %1549 = vmatprep.subr.bf16.mxu0 0
    %1550 = vmatpush1.bf16.msra.mxu0 0
    %1551 = vmatprep.subr.bf16.mxu0 0
    %1552 = vmatpush1.bf16.msra.mxu0 0
    %1553 = vmatprep.subr.bf16.mxu0 0
    %1554 = vmatpush1.bf16.msra.mxu0 0
    %1555 = vmatprep.subr.bf16.mxu0 0
    %1556 = vmatpush1.bf16.msra.mxu0 0
    %1557 = vmatprep.subr.bf16.mxu0 0
    %1558 = vmatpush1.bf16.msra.mxu0 0
    %1559 = vmatprep.subr.bf16.mxu0 0
    %1560 = vmatpush1.bf16.msra.mxu0 0
    %1561 = vmatprep.mubr.bf16.mxu0 0
    %1562 = vmatmul.mubr.bf16.gmra.mrb[0].mxu0 %v1336
    %v1563 = vpop.f32.mrb[0].mxu0
    %v1564 = vadd.f32 0.0, %v1563
    %v1565 = vpop.f32.mrb[0].mxu0
    %v1566 = vadd.f32 0.0, %v1565
    %v1567 = vpop.f32.mrb[0].mxu0
    %v1568 = vpop.f32.mrb[0].mxu0
    %1569 = vdwg.mxu0
    %1570 = vmatprep.subr.bf16.mxu0 %v1468
    %1571 = vmatpush1.bf16.msra.mxu0 %v1467
    %1572 = vmatprep.subr.bf16.mxu0 %v1472
    %1573 = vmatpush1.bf16.msra.mxu0 %v1471
    %1574 = vmatprep.subr.bf16.mxu0 %v1476
    %1575 = vmatpush1.bf16.msra.mxu0 %v1475
    %1576 = vmatprep.subr.bf16.mxu0 %v1480
    %1577 = vmatpush1.bf16.msra.mxu0 %v1479
    %1578 = vmatprep.subr.bf16.mxu0 %v1484
    %1579 = vmatpush1.bf16.msra.mxu0 %v1483
    %1580 = vmatprep.subr.bf16.mxu0 %v1488
    %1581 = vmatpush1.bf16.msra.mxu0 %v1487
    %1582 = vmatprep.subr.bf16.mxu0 %v1492
    %1583 = vmatpush1.bf16.msra.mxu0 %v1491
    %1584 = vmatprep.subr.bf16.mxu0 %v1496
    %1585 = vmatpush1.bf16.msra.mxu0 %v1495
    %1586 = vmatprep.subr.bf16.mxu0 0
    %1587 = vmatpush1.bf16.msra.mxu0 0
    %1588 = vmatprep.subr.bf16.mxu0 0
    %1589 = vmatpush1.bf16.msra.mxu0 0
    %1590 = vmatprep.subr.bf16.mxu0 0
    %1591 = vmatpush1.bf16.msra.mxu0 0
    %1592 = vmatprep.subr.bf16.mxu0 0
    %1593 = vmatpush1.bf16.msra.mxu0 0
    %1594 = vmatprep.subr.bf16.mxu0 0
    %1595 = vmatpush1.bf16.msra.mxu0 0
    %1596 = vmatprep.subr.bf16.mxu0 0
    %1597 = vmatpush1.bf16.msra.mxu0 0
    %1598 = vmatprep.subr.bf16.mxu0 0
    %1599 = vmatpush1.bf16.msra.mxu0 0
    %1600 = vmatprep.subr.bf16.mxu0 0
    %1601 = vmatpush1.bf16.msra.mxu0 0
    %1602 = vmatprep.mubr.bf16.mxu0 0
    %1603 = vmatmul.mubr.bf16.gmra.mrb[0].mxu0 %v1336
    %v1604 = vpop.f32.mrb[0].mxu0
    %v1605 = vadd.f32 0.0, %v1604
    %v1606 = vpop.f32.mrb[0].mxu0
    %v1607 = vadd.f32 0.0, %v1606
    %v1608 = vpop.f32.mrb[0].mxu0
    %v1609 = vpop.f32.mrb[0].mxu0
    %1610 = vdwg.mxu0
    %v1611 = vadd.f32 %v1332, %v1564
    %v1612 = vadd.f32 %v1333, %v1566
    %v1613 = vadd.f32 %v1334, %v1605
    %v1614 = vadd.f32 %v1335, %v1607
    %v1615 = vxor.u32 %v1611, 2147483648
    %v1616 = vmul.f32 %v1615, 1.442695
    %v1617 = vpow.pop %v1616
    %v1618 = vadd.f32 %v1617, 1.0
    %v1619 = vrcp.pop %v1618
    %v1620 = vmul.f32 1.0, %v1619
    %v1621 = vxor.u32 %v1612, 2147483648
    %v1622 = vmul.f32 %v1621, 1.442695
    %v1623 = vpow.pop %v1622
    %v1624 = vadd.f32 %v1623, 1.0
    %v1625 = vrcp.pop %v1624
    %v1626 = vmul.f32 1.0, %v1625
    %v1627 = vtanh.pop %v1613
    %v1628 = vxor.u32 %v1614, 2147483648
    %v1629 = vmul.f32 %v1628, 1.442695
    %v1630 = vpow.pop %v1629
    %v1631 = vadd.f32 %v1630, 1.0
    %v1632 = vrcp.pop %v1631
    %v1633 = vmul.f32 1.0, %v1632
    %v1634 = vmul.f32 %v1626, %v1324
    %v1635 = vmul.f32 %v1620, %v1627
    %v1636 = vadd.f32 %v1634, %v1635
    %v1637 = vtanh.pop %v1636
    %v1638 = vmul.f32 %v1633, %v1637
    %s1639 = scalar_lea.vmem [#allocation12], 32
    %1640 = vst [vmem:[%s1639] sm:$0xff] %v1638
    %s1641 = scalar_lea.vmem [#allocation4], 80
    %v1642 = vld [vmem:[%s1641] sm:$0xff]
    %v1643 = vld [vmem:[%s1641 + $0x8] sm:$0xff]
    %v1644 = vunpack.c.l.bf16 %v1642
    %v1645 = vunpack.c.h.bf16 %v1642
    %v1646 = vunpack.c.l.bf16 %v1643
    %v1647 = vunpack.c.h.bf16 %v1643
    %v1648 = vpack.c.bf16 %v1638, %v1638
    %v1649 = vld [vmem:[#allocation10] sm:$0xff]
    %v1650 = vld [vmem:[#allocation10 + $0x8] sm:$0xff]
    %v1651 = vld [vmem:[#allocation10 + $0x10] sm:$0xff]
    %v1652 = vld [vmem:[#allocation10 + $0x18] sm:$0xff]
    %v1653 = vld [vmem:[#allocation10 + $0x20] sm:$0xff]
    %v1654 = vld [vmem:[#allocation10 + $0x28] sm:$0xff]
    %v1655 = vld [vmem:[#allocation10 + $0x30] sm:$0xff]
    %v1656 = vld [vmem:[#allocation10 + $0x38] sm:$0xff]
    %v1657 = vld [vmem:[#allocation10 + $0x40] sm:$0xff]
    %v1658 = vld [vmem:[#allocation10 + $0x48] sm:$0xff]
    %v1659 = vld [vmem:[#allocation10 + $0x50] sm:$0xff]
    %v1660 = vld [vmem:[#allocation10 + $0x58] sm:$0xff]
    %v1661 = vld [vmem:[#allocation10 + $0x60] sm:$0xff]
    %v1662 = vld [vmem:[#allocation10 + $0x68] sm:$0xff]
    %v1663 = vld [vmem:[#allocation10 + $0x70] sm:$0xff]
    %v1664 = vld [vmem:[#allocation10 + $0x78] sm:$0xff]
    %v1665 = vld [vmem:[#allocation10 + $0x80] sm:$0xff]
    %v1666 = vld [vmem:[#allocation10 + $0x88] sm:$0xff]
    %v1667 = vld [vmem:[#allocation10 + $0x90] sm:$0xff]
    %v1668 = vld [vmem:[#allocation10 + $0x98] sm:$0xff]
    %v1669 = vld [vmem:[#allocation10 + $0xa0] sm:$0xff]
    %v1670 = vld [vmem:[#allocation10 + $0xa8] sm:$0xff]
    %v1671 = vld [vmem:[#allocation10 + $0xb0] sm:$0xff]
    %v1672 = vld [vmem:[#allocation10 + $0xb8] sm:$0xff]
    %v1673 = vld [vmem:[#allocation10 + $0xc0] sm:$0xff]
    %v1674 = vld [vmem:[#allocation10 + $0xc8] sm:$0xff]
    %v1675 = vld [vmem:[#allocation10 + $0xd0] sm:$0xff]
    %v1676 = vld [vmem:[#allocation10 + $0xd8] sm:$0xff]
    %v1677 = vld [vmem:[#allocation10 + $0xe0] sm:$0xff]
    %v1678 = vld [vmem:[#allocation10 + $0xe8] sm:$0xff]
    %v1679 = vld [vmem:[#allocation10 + $0xf0] sm:$0xff]
    %v1680 = vld [vmem:[#allocation10 + $0xf8] sm:$0xff]
    %v1713 = vunpack.c.l.b16 %v1649
    %v1714 = vunpack.c.h.b16 %v1649
    %v1715 = vunpack.c.l.b16 %v1650
    %v1716 = vunpack.c.h.b16 %v1650
    %v1717 = vunpack.c.l.b16 %v1651
    %v1718 = vunpack.c.h.b16 %v1651
    %v1719 = vunpack.c.l.b16 %v1652
    %v1720 = vunpack.c.h.b16 %v1652
    %v1721 = vunpack.c.l.b16 %v1653
    %v1722 = vunpack.c.h.b16 %v1653
    %v1723 = vunpack.c.l.b16 %v1654
    %v1724 = vunpack.c.h.b16 %v1654
    %v1725 = vunpack.c.l.b16 %v1655
    %v1726 = vunpack.c.h.b16 %v1655
    %v1727 = vunpack.c.l.b16 %v1656
    %v1728 = vunpack.c.h.b16 %v1656
    %v1729 = vunpack.c.l.b16 %v1657
    %v1730 = vunpack.c.h.b16 %v1657
    %v1731 = vunpack.c.l.b16 %v1658
    %v1732 = vunpack.c.h.b16 %v1658
    %v1733 = vunpack.c.l.b16 %v1659
    %v1734 = vunpack.c.h.b16 %v1659
    %v1735 = vunpack.c.l.b16 %v1660
    %v1736 = vunpack.c.h.b16 %v1660
    %v1737 = vunpack.c.l.b16 %v1661
    %v1738 = vunpack.c.h.b16 %v1661
    %v1739 = vunpack.c.l.b16 %v1662
    %v1740 = vunpack.c.h.b16 %v1662
    %v1741 = vunpack.c.l.b16 %v1663
    %v1742 = vunpack.c.h.b16 %v1663
    %v1743 = vunpack.c.l.b16 %v1664
    %v1744 = vunpack.c.h.b16 %v1664
    %v1745 = vunpack.c.l.b16 %v1665
    %v1746 = vunpack.c.h.b16 %v1665
    %v1747 = vunpack.c.l.b16 %v1666
    %v1748 = vunpack.c.h.b16 %v1666
    %v1749 = vunpack.c.l.b16 %v1667
    %v1750 = vunpack.c.h.b16 %v1667
    %v1751 = vunpack.c.l.b16 %v1668
    %v1752 = vunpack.c.h.b16 %v1668
    %v1753 = vunpack.c.l.b16 %v1669
    %v1754 = vunpack.c.h.b16 %v1669
    %v1755 = vunpack.c.l.b16 %v1670
    %v1756 = vunpack.c.h.b16 %v1670
    %v1757 = vunpack.c.l.b16 %v1671
    %v1758 = vunpack.c.h.b16 %v1671
    %v1759 = vunpack.c.l.b16 %v1672
    %v1760 = vunpack.c.h.b16 %v1672
    %v1761 = vunpack.c.l.b16 %v1673
    %v1762 = vunpack.c.h.b16 %v1673
    %v1763 = vunpack.c.l.b16 %v1674
    %v1764 = vunpack.c.h.b16 %v1674
    %v1765 = vunpack.c.l.b16 %v1675
    %v1766 = vunpack.c.h.b16 %v1675
    %v1767 = vunpack.c.l.b16 %v1676
    %v1768 = vunpack.c.h.b16 %v1676
    %v1769 = vunpack.c.l.b16 %v1677
    %v1770 = vunpack.c.h.b16 %v1677
    %v1771 = vunpack.c.l.b16 %v1678
    %v1772 = vunpack.c.h.b16 %v1678
    %v1773 = vunpack.c.l.b16 %v1679
    %v1774 = vunpack.c.h.b16 %v1679
    %v1775 = vunpack.c.l.b16 %v1680
    %v1776 = vunpack.c.h.b16 %v1680
    %v1777 = vpack.c.b16 %v1717, %v1713
    %v1778 = vpack.c.b16 %v1718, %v1714
    %v1779 = vpack.c.b16 %v1719, %v1715
    %v1780 = vpack.c.b16 %v1720, %v1716
    %v1781 = vpack.c.b16 %v1725, %v1721
    %v1782 = vpack.c.b16 %v1726, %v1722
    %v1783 = vpack.c.b16 %v1727, %v1723
    %v1784 = vpack.c.b16 %v1728, %v1724
    %v1785 = vpack.c.b16 %v1733, %v1729
    %v1786 = vpack.c.b16 %v1734, %v1730
    %v1787 = vpack.c.b16 %v1735, %v1731
    %v1788 = vpack.c.b16 %v1736, %v1732
    %v1789 = vpack.c.b16 %v1741, %v1737
    %v1790 = vpack.c.b16 %v1742, %v1738
    %v1791 = vpack.c.b16 %v1743, %v1739
    %v1792 = vpack.c.b16 %v1744, %v1740
    %v1793 = vpack.c.b16 %v1749, %v1745
    %v1794 = vpack.c.b16 %v1750, %v1746
    %v1795 = vpack.c.b16 %v1751, %v1747
    %v1796 = vpack.c.b16 %v1752, %v1748
    %v1797 = vpack.c.b16 %v1757, %v1753
    %v1798 = vpack.c.b16 %v1758, %v1754
    %v1799 = vpack.c.b16 %v1759, %v1755
    %v1800 = vpack.c.b16 %v1760, %v1756
    %v1801 = vpack.c.b16 %v1765, %v1761
    %v1802 = vpack.c.b16 %v1766, %v1762
    %v1803 = vpack.c.b16 %v1767, %v1763
    %v1804 = vpack.c.b16 %v1768, %v1764
    %v1805 = vpack.c.b16 %v1773, %v1769
    %v1806 = vpack.c.b16 %v1774, %v1770
    %v1807 = vpack.c.b16 %v1775, %v1771
    %v1808 = vpack.c.b16 %v1776, %v1772
    %1841 = vmatprep.subr.bf16.mxu0 %v1778
    %1842 = vmatpush1.bf16.msra.mxu0 %v1777
    %1843 = vmatprep.subr.bf16.mxu0 %v1782
    %1844 = vmatpush1.bf16.msra.mxu0 %v1781
    %1845 = vmatprep.subr.bf16.mxu0 %v1786
    %1846 = vmatpush1.bf16.msra.mxu0 %v1785
    %1847 = vmatprep.subr.bf16.mxu0 %v1790
    %1848 = vmatpush1.bf16.msra.mxu0 %v1789
    %1849 = vmatprep.subr.bf16.mxu0 %v1794
    %1850 = vmatpush1.bf16.msra.mxu0 %v1793
    %1851 = vmatprep.subr.bf16.mxu0 %v1798
    %1852 = vmatpush1.bf16.msra.mxu0 %v1797
    %1853 = vmatprep.subr.bf16.mxu0 %v1802
    %1854 = vmatpush1.bf16.msra.mxu0 %v1801
    %1855 = vmatprep.subr.bf16.mxu0 %v1806
    %1856 = vmatpush1.bf16.msra.mxu0 %v1805
    %1857 = vmatprep.subr.bf16.mxu0 0
    %1858 = vmatpush1.bf16.msra.mxu0 0
    %1859 = vmatprep.subr.bf16.mxu0 0
    %1860 = vmatpush1.bf16.msra.mxu0 0
    %1861 = vmatprep.subr.bf16.mxu0 0
    %1862 = vmatpush1.bf16.msra.mxu0 0
    %1863 = vmatprep.subr.bf16.mxu0 0
    %1864 = vmatpush1.bf16.msra.mxu0 0
    %1865 = vmatprep.subr.bf16.mxu0 0
    %1866 = vmatpush1.bf16.msra.mxu0 0
    %1867 = vmatprep.subr.bf16.mxu0 0
    %1868 = vmatpush1.bf16.msra.mxu0 0
    %1869 = vmatprep.subr.bf16.mxu0 0
    %1870 = vmatpush1.bf16.msra.mxu0 0
    %1871 = vmatprep.subr.bf16.mxu0 0
    %1872 = vmatpush1.bf16.msra.mxu0 0
    %1873 = vmatprep.mubr.bf16.mxu0 0
    %1874 = vmatmul.mubr.bf16.gmra.mrb[0].mxu0 %v1648
    %v1875 = vpop.f32.mrb[0].mxu0
    %v1876 = vadd.f32 0.0, %v1875
    %v1877 = vpop.f32.mrb[0].mxu0
    %v1878 = vadd.f32 0.0, %v1877
    %v1879 = vpop.f32.mrb[0].mxu0
    %v1880 = vpop.f32.mrb[0].mxu0
    %1881 = vdwg.mxu0
    %1882 = vmatprep.subr.bf16.mxu0 %v1780
    %1883 = vmatpush1.bf16.msra.mxu0 %v1779
    %1884 = vmatprep.subr.bf16.mxu0 %v1784
    %1885 = vmatpush1.bf16.msra.mxu0 %v1783
    %1886 = vmatprep.subr.bf16.mxu0 %v1788
    %1887 = vmatpush1.bf16.msra.mxu0 %v1787
    %1888 = vmatprep.subr.bf16.mxu0 %v1792
    %1889 = vmatpush1.bf16.msra.mxu0 %v1791
    %1890 = vmatprep.subr.bf16.mxu0 %v1796
    %1891 = vmatpush1.bf16.msra.mxu0 %v1795
    %1892 = vmatprep.subr.bf16.mxu0 %v1800
    %1893 = vmatpush1.bf16.msra.mxu0 %v1799
    %1894 = vmatprep.subr.bf16.mxu0 %v1804
    %1895 = vmatpush1.bf16.msra.mxu0 %v1803
    %1896 = vmatprep.subr.bf16.mxu0 %v1808
    %1897 = vmatpush1.bf16.msra.mxu0 %v1807
    %1898 = vmatprep.subr.bf16.mxu0 0
    %1899 = vmatpush1.bf16.msra.mxu0 0
    %1900 = vmatprep.subr.bf16.mxu0 0
    %1901 = vmatpush1.bf16.msra.mxu0 0
    %1902 = vmatprep.subr.bf16.mxu0 0
    %1903 = vmatpush1.bf16.msra.mxu0 0
    %1904 = vmatprep.subr.bf16.mxu0 0
    %1905 = vmatpush1.bf16.msra.mxu0 0
    %1906 = vmatprep.subr.bf16.mxu0 0
    %1907 = vmatpush1.bf16.msra.mxu0 0
    %1908 = vmatprep.subr.bf16.mxu0 0
    %1909 = vmatpush1.bf16.msra.mxu0 0
    %1910 = vmatprep.subr.bf16.mxu0 0
    %1911 = vmatpush1.bf16.msra.mxu0 0
    %1912 = vmatprep.subr.bf16.mxu0 0
    %1913 = vmatpush1.bf16.msra.mxu0 0
    %1914 = vmatprep.mubr.bf16.mxu0 0
    %1915 = vmatmul.mubr.bf16.gmra.mrb[0].mxu0 %v1648
    %v1916 = vpop.f32.mrb[0].mxu0
    %v1917 = vadd.f32 0.0, %v1916
    %v1918 = vpop.f32.mrb[0].mxu0
    %v1919 = vadd.f32 0.0, %v1918
    %v1920 = vpop.f32.mrb[0].mxu0
    %v1921 = vpop.f32.mrb[0].mxu0
    %1922 = vdwg.mxu0
    %v1923 = vadd.f32 %v1644, %v1876
    %v1924 = vadd.f32 %v1645, %v1878
    %v1925 = vadd.f32 %v1646, %v1917
    %v1926 = vadd.f32 %v1647, %v1919
    %v1927 = vxor.u32 %v1923, 2147483648
    %v1928 = vmul.f32 %v1927, 1.442695
    %v1929 = vpow.pop %v1928
    %v1930 = vadd.f32 %v1929, 1.0
    %v1931 = vrcp.pop %v1930
    %v1932 = vmul.f32 1.0, %v1931
    %v1933 = vxor.u32 %v1924, 2147483648
    %v1934 = vmul.f32 %v1933, 1.442695
    %v1935 = vpow.pop %v1934
    %v1936 = vadd.f32 %v1935, 1.0
    %v1937 = vrcp.pop %v1936
    %v1938 = vmul.f32 1.0, %v1937
    %v1939 = vtanh.pop %v1925
    %v1940 = vxor.u32 %v1926, 2147483648
    %v1941 = vmul.f32 %v1940, 1.442695
    %v1942 = vpow.pop %v1941
    %v1943 = vadd.f32 %v1942, 1.0
    %v1944 = vrcp.pop %v1943
    %v1945 = vmul.f32 1.0, %v1944
    %v1946 = vmul.f32 %v1938, %v1636
    %v1947 = vmul.f32 %v1932, %v1939
    %v1948 = vadd.f32 %v1946, %v1947
    %v1949 = vtanh.pop %v1948
    %v1950 = vmul.f32 %v1945, %v1949
    %s1951 = scalar_lea.vmem [#allocation12], 40
    %1952 = vst [vmem:[%s1951] sm:$0xff] %v1950
    %s1953 = scalar_lea.vmem [#allocation4], 96
    %v1954 = vld [vmem:[%s1953] sm:$0xff]
    %v1955 = vld [vmem:[%s1953 + $0x8] sm:$0xff]
    %v1956 = vunpack.c.l.bf16 %v1954
    %v1957 = vunpack.c.h.bf16 %v1954
    %v1958 = vunpack.c.l.bf16 %v1955
    %v1959 = vunpack.c.h.bf16 %v1955
    %v1960 = vpack.c.bf16 %v1950, %v1950
    %v1961 = vld [vmem:[#allocation10] sm:$0xff]
    %v1962 = vld [vmem:[#allocation10 + $0x8] sm:$0xff]
    %v1963 = vld [vmem:[#allocation10 + $0x10] sm:$0xff]
    %v1964 = vld [vmem:[#allocation10 + $0x18] sm:$0xff]
    %v1965 = vld [vmem:[#allocation10 + $0x20] sm:$0xff]
    %v1966 = vld [vmem:[#allocation10 + $0x28] sm:$0xff]
    %v1967 = vld [vmem:[#allocation10 + $0x30] sm:$0xff]
    %v1968 = vld [vmem:[#allocation10 + $0x38] sm:$0xff]
    %v1969 = vld [vmem:[#allocation10 + $0x40] sm:$0xff]
    %v1970 = vld [vmem:[#allocation10 + $0x48] sm:$0xff]
    %v1971 = vld [vmem:[#allocation10 + $0x50] sm:$0xff]
    %v1972 = vld [vmem:[#allocation10 + $0x58] sm:$0xff]
    %v1973 = vld [vmem:[#allocation10 + $0x60] sm:$0xff]
    %v1974 = vld [vmem:[#allocation10 + $0x68] sm:$0xff]
    %v1975 = vld [vmem:[#allocation10 + $0x70] sm:$0xff]
    %v1976 = vld [vmem:[#allocation10 + $0x78] sm:$0xff]
    %v1977 = vld [vmem:[#allocation10 + $0x80] sm:$0xff]
    %v1978 = vld [vmem:[#allocation10 + $0x88] sm:$0xff]
    %v1979 = vld [vmem:[#allocation10 + $0x90] sm:$0xff]
    %v1980 = vld [vmem:[#allocation10 + $0x98] sm:$0xff]
    %v1981 = vld [vmem:[#allocation10 + $0xa0] sm:$0xff]
    %v1982 = vld [vmem:[#allocation10 + $0xa8] sm:$0xff]
    %v1983 = vld [vmem:[#allocation10 + $0xb0] sm:$0xff]
    %v1984 = vld [vmem:[#allocation10 + $0xb8] sm:$0xff]
    %v1985 = vld [vmem:[#allocation10 + $0xc0] sm:$0xff]
    %v1986 = vld [vmem:[#allocation10 + $0xc8] sm:$0xff]
    %v1987 = vld [vmem:[#allocation10 + $0xd0] sm:$0xff]
    %v1988 = vld [vmem:[#allocation10 + $0xd8] sm:$0xff]
    %v1989 = vld [vmem:[#allocation10 + $0xe0] sm:$0xff]
    %v1990 = vld [vmem:[#allocation10 + $0xe8] sm:$0xff]
    %v1991 = vld [vmem:[#allocation10 + $0xf0] sm:$0xff]
    %v1992 = vld [vmem:[#allocation10 + $0xf8] sm:$0xff]
    %v2025 = vunpack.c.l.b16 %v1961
    %v2026 = vunpack.c.h.b16 %v1961
    %v2027 = vunpack.c.l.b16 %v1962
    %v2028 = vunpack.c.h.b16 %v1962
    %v2029 = vunpack.c.l.b16 %v1963
    %v2030 = vunpack.c.h.b16 %v1963
    %v2031 = vunpack.c.l.b16 %v1964
    %v2032 = vunpack.c.h.b16 %v1964
    %v2033 = vunpack.c.l.b16 %v1965
    %v2034 = vunpack.c.h.b16 %v1965
    %v2035 = vunpack.c.l.b16 %v1966
    %v2036 = vunpack.c.h.b16 %v1966
    %v2037 = vunpack.c.l.b16 %v1967
    %v2038 = vunpack.c.h.b16 %v1967
    %v2039 = vunpack.c.l.b16 %v1968
    %v2040 = vunpack.c.h.b16 %v1968
    %v2041 = vunpack.c.l.b16 %v1969
    %v2042 = vunpack.c.h.b16 %v1969
    %v2043 = vunpack.c.l.b16 %v1970
    %v2044 = vunpack.c.h.b16 %v1970
    %v2045 = vunpack.c.l.b16 %v1971
    %v2046 = vunpack.c.h.b16 %v1971
    %v2047 = vunpack.c.l.b16 %v1972
    %v2048 = vunpack.c.h.b16 %v1972
    %v2049 = vunpack.c.l.b16 %v1973
    %v2050 = vunpack.c.h.b16 %v1973
    %v2051 = vunpack.c.l.b16 %v1974
    %v2052 = vunpack.c.h.b16 %v1974
    %v2053 = vunpack.c.l.b16 %v1975
    %v2054 = vunpack.c.h.b16 %v1975
    %v2055 = vunpack.c.l.b16 %v1976
    %v2056 = vunpack.c.h.b16 %v1976
    %v2057 = vunpack.c.l.b16 %v1977
    %v2058 = vunpack.c.h.b16 %v1977
    %v2059 = vunpack.c.l.b16 %v1978
    %v2060 = vunpack.c.h.b16 %v1978
    %v2061 = vunpack.c.l.b16 %v1979
    %v2062 = vunpack.c.h.b16 %v1979
    %v2063 = vunpack.c.l.b16 %v1980
    %v2064 = vunpack.c.h.b16 %v1980
    %v2065 = vunpack.c.l.b16 %v1981
    %v2066 = vunpack.c.h.b16 %v1981
    %v2067 = vunpack.c.l.b16 %v1982
    %v2068 = vunpack.c.h.b16 %v1982
    %v2069 = vunpack.c.l.b16 %v1983
    %v2070 = vunpack.c.h.b16 %v1983
    %v2071 = vunpack.c.l.b16 %v1984
    %v2072 = vunpack.c.h.b16 %v1984
    %v2073 = vunpack.c.l.b16 %v1985
    %v2074 = vunpack.c.h.b16 %v1985
    %v2075 = vunpack.c.l.b16 %v1986
    %v2076 = vunpack.c.h.b16 %v1986
    %v2077 = vunpack.c.l.b16 %v1987
    %v2078 = vunpack.c.h.b16 %v1987
    %v2079 = vunpack.c.l.b16 %v1988
    %v2080 = vunpack.c.h.b16 %v1988
    %v2081 = vunpack.c.l.b16 %v1989
    %v2082 = vunpack.c.h.b16 %v1989
    %v2083 = vunpack.c.l.b16 %v1990
    %v2084 = vunpack.c.h.b16 %v1990
    %v2085 = vunpack.c.l.b16 %v1991
    %v2086 = vunpack.c.h.b16 %v1991
    %v2087 = vunpack.c.l.b16 %v1992
    %v2088 = vunpack.c.h.b16 %v1992
    %v2089 = vpack.c.b16 %v2029, %v2025
    %v2090 = vpack.c.b16 %v2030, %v2026
    %v2091 = vpack.c.b16 %v2031, %v2027
    %v2092 = vpack.c.b16 %v2032, %v2028
    %v2093 = vpack.c.b16 %v2037, %v2033
    %v2094 = vpack.c.b16 %v2038, %v2034
    %v2095 = vpack.c.b16 %v2039, %v2035
    %v2096 = vpack.c.b16 %v2040, %v2036
    %v2097 = vpack.c.b16 %v2045, %v2041
    %v2098 = vpack.c.b16 %v2046, %v2042
    %v2099 = vpack.c.b16 %v2047, %v2043
    %v2100 = vpack.c.b16 %v2048, %v2044
    %v2101 = vpack.c.b16 %v2053, %v2049
    %v2102 = vpack.c.b16 %v2054, %v2050
    %v2103 = vpack.c.b16 %v2055, %v2051
    %v2104 = vpack.c.b16 %v2056, %v2052
    %v2105 = vpack.c.b16 %v2061, %v2057
    %v2106 = vpack.c.b16 %v2062, %v2058
    %v2107 = vpack.c.b16 %v2063, %v2059
    %v2108 = vpack.c.b16 %v2064, %v2060
    %v2109 = vpack.c.b16 %v2069, %v2065
    %v2110 = vpack.c.b16 %v2070, %v2066
    %v2111 = vpack.c.b16 %v2071, %v2067
    %v2112 = vpack.c.b16 %v2072, %v2068
    %v2113 = vpack.c.b16 %v2077, %v2073
    %v2114 = vpack.c.b16 %v2078, %v2074
    %v2115 = vpack.c.b16 %v2079, %v2075
    %v2116 = vpack.c.b16 %v2080, %v2076
    %v2117 = vpack.c.b16 %v2085, %v2081
    %v2118 = vpack.c.b16 %v2086, %v2082
    %v2119 = vpack.c.b16 %v2087, %v2083
    %v2120 = vpack.c.b16 %v2088, %v2084
    %2153 = vmatprep.subr.bf16.mxu0 %v2090
    %2154 = vmatpush1.bf16.msra.mxu0 %v2089
    %2155 = vmatprep.subr.bf16.mxu0 %v2094
    %2156 = vmatpush1.bf16.msra.mxu0 %v2093
    %2157 = vmatprep.subr.bf16.mxu0 %v2098
    %2158 = vmatpush1.bf16.msra.mxu0 %v2097
    %2159 = vmatprep.subr.bf16.mxu0 %v2102
    %2160 = vmatpush1.bf16.msra.mxu0 %v2101
    %2161 = vmatprep.subr.bf16.mxu0 %v2106
    %2162 = vmatpush1.bf16.msra.mxu0 %v2105
    %2163 = vmatprep.subr.bf16.mxu0 %v2110
    %2164 = vmatpush1.bf16.msra.mxu0 %v2109
    %2165 = vmatprep.subr.bf16.mxu0 %v2114
    %2166 = vmatpush1.bf16.msra.mxu0 %v2113
    %2167 = vmatprep.subr.bf16.mxu0 %v2118
    %2168 = vmatpush1.bf16.msra.mxu0 %v2117
    %2169 = vmatprep.subr.bf16.mxu0 0
    %2170 = vmatpush1.bf16.msra.mxu0 0
    %2171 = vmatprep.subr.bf16.mxu0 0
    %2172 = vmatpush1.bf16.msra.mxu0 0
    %2173 = vmatprep.subr.bf16.mxu0 0
    %2174 = vmatpush1.bf16.msra.mxu0 0
    %2175 = vmatprep.subr.bf16.mxu0 0
    %2176 = vmatpush1.bf16.msra.mxu0 0
    %2177 = vmatprep.subr.bf16.mxu0 0
    %2178 = vmatpush1.bf16.msra.mxu0 0
    %2179 = vmatprep.subr.bf16.mxu0 0
    %2180 = vmatpush1.bf16.msra.mxu0 0
    %2181 = vmatprep.subr.bf16.mxu0 0
    %2182 = vmatpush1.bf16.msra.mxu0 0
    %2183 = vmatprep.subr.bf16.mxu0 0
    %2184 = vmatpush1.bf16.msra.mxu0 0
    %2185 = vmatprep.mubr.bf16.mxu0 0
    %2186 = vmatmul.mubr.bf16.gmra.mrb[0].mxu0 %v1960
    %v2187 = vpop.f32.mrb[0].mxu0
    %v2188 = vadd.f32 0.0, %v2187
    %v2189 = vpop.f32.mrb[0].mxu0
    %v2190 = vadd.f32 0.0, %v2189
    %v2191 = vpop.f32.mrb[0].mxu0
    %v2192 = vpop.f32.mrb[0].mxu0
    %2193 = vdwg.mxu0
    %2194 = vmatprep.subr.bf16.mxu0 %v2092
    %2195 = vmatpush1.bf16.msra.mxu0 %v2091
    %2196 = vmatprep.subr.bf16.mxu0 %v2096
    %2197 = vmatpush1.bf16.msra.mxu0 %v2095
    %2198 = vmatprep.subr.bf16.mxu0 %v2100
    %2199 = vmatpush1.bf16.msra.mxu0 %v2099
    %2200 = vmatprep.subr.bf16.mxu0 %v2104
    %2201 = vmatpush1.bf16.msra.mxu0 %v2103
    %2202 = vmatprep.subr.bf16.mxu0 %v2108
    %2203 = vmatpush1.bf16.msra.mxu0 %v2107
    %2204 = vmatprep.subr.bf16.mxu0 %v2112
    %2205 = vmatpush1.bf16.msra.mxu0 %v2111
    %2206 = vmatprep.subr.bf16.mxu0 %v2116
    %2207 = vmatpush1.bf16.msra.mxu0 %v2115
    %2208 = vmatprep.subr.bf16.mxu0 %v2120
    %2209 = vmatpush1.bf16.msra.mxu0 %v2119
    %2210 = vmatprep.subr.bf16.mxu0 0
    %2211 = vmatpush1.bf16.msra.mxu0 0
    %2212 = vmatprep.subr.bf16.mxu0 0
    %2213 = vmatpush1.bf16.msra.mxu0 0
    %2214 = vmatprep.subr.bf16.mxu0 0
    %2215 = vmatpush1.bf16.msra.mxu0 0
    %2216 = vmatprep.subr.bf16.mxu0 0
    %2217 = vmatpush1.bf16.msra.mxu0 0
    %2218 = vmatprep.subr.bf16.mxu0 0
    %2219 = vmatpush1.bf16.msra.mxu0 0
    %2220 = vmatprep.subr.bf16.mxu0 0
    %2221 = vmatpush1.bf16.msra.mxu0 0
    %2222 = vmatprep.subr.bf16.mxu0 0
    %2223 = vmatpush1.bf16.msra.mxu0 0
    %2224 = vmatprep.subr.bf16.mxu0 0
    %2225 = vmatpush1.bf16.msra.mxu0 0
    %2226 = vmatprep.mubr.bf16.mxu0 0
    %2227 = vmatmul.mubr.bf16.gmra.mrb[0].mxu0 %v1960
    %v2228 = vpop.f32.mrb[0].mxu0
    %v2229 = vadd.f32 0.0, %v2228
    %v2230 = vpop.f32.mrb[0].mxu0
    %v2231 = vadd.f32 0.0, %v2230
    %v2232 = vpop.f32.mrb[0].mxu0
    %v2233 = vpop.f32.mrb[0].mxu0
    %2234 = vdwg.mxu0
    %v2235 = vadd.f32 %v1956, %v2188
    %v2236 = vadd.f32 %v1957, %v2190
    %v2237 = vadd.f32 %v1958, %v2229
    %v2238 = vadd.f32 %v1959, %v2231
    %v2239 = vxor.u32 %v2235, 2147483648
    %v2240 = vmul.f32 %v2239, 1.442695
    %v2241 = vpow.pop %v2240
    %v2242 = vadd.f32 %v2241, 1.0
    %v2243 = vrcp.pop %v2242
    %v2244 = vmul.f32 1.0, %v2243
    %v2245 = vxor.u32 %v2236, 2147483648
    %v2246 = vmul.f32 %v2245, 1.442695
    %v2247 = vpow.pop %v2246
    %v2248 = vadd.f32 %v2247, 1.0
    %v2249 = vrcp.pop %v2248
    %v2250 = vmul.f32 1.0, %v2249
    %v2251 = vtanh.pop %v2237
    %v2252 = vxor.u32 %v2238, 2147483648
    %v2253 = vmul.f32 %v2252, 1.442695
    %v2254 = vpow.pop %v2253
    %v2255 = vadd.f32 %v2254, 1.0
    %v2256 = vrcp.pop %v2255
    %v2257 = vmul.f32 1.0, %v2256
    %v2258 = vmul.f32 %v2250, %v1948
    %v2259 = vmul.f32 %v2244, %v2251
    %v2260 = vadd.f32 %v2258, %v2259
    %v2261 = vtanh.pop %v2260
    %v2262 = vmul.f32 %v2257, %v2261
    %s2263 = scalar_lea.vmem [#allocation12], 48
    %2264 = vst [vmem:[%s2263] sm:$0xff] %v2262
    %s2265 = scalar_lea.vmem [#allocation4], 112
    %v2266 = vld [vmem:[%s2265] sm:$0xff]
    %v2267 = vld [vmem:[%s2265 + $0x8] sm:$0xff]
    %v2268 = vunpack.c.l.bf16 %v2266
    %v2269 = vunpack.c.h.bf16 %v2266
    %v2270 = vunpack.c.l.bf16 %v2267
    %v2271 = vunpack.c.h.bf16 %v2267
    %v2272 = vpack.c.bf16 %v2262, %v2262
    %v2273 = vld [vmem:[#allocation10] sm:$0xff]
    %v2274 = vld [vmem:[#allocation10 + $0x8] sm:$0xff]
    %v2275 = vld [vmem:[#allocation10 + $0x10] sm:$0xff]
    %v2276 = vld [vmem:[#allocation10 + $0x18] sm:$0xff]
    %v2277 = vld [vmem:[#allocation10 + $0x20] sm:$0xff]
    %v2278 = vld [vmem:[#allocation10 + $0x28] sm:$0xff]
    %v2279 = vld [vmem:[#allocation10 + $0x30] sm:$0xff]
    %v2280 = vld [vmem:[#allocation10 + $0x38] sm:$0xff]
    %v2281 = vld [vmem:[#allocation10 + $0x40] sm:$0xff]
    %v2282 = vld [vmem:[#allocation10 + $0x48] sm:$0xff]
    %v2283 = vld [vmem:[#allocation10 + $0x50] sm:$0xff]
    %v2284 = vld [vmem:[#allocation10 + $0x58] sm:$0xff]
    %v2285 = vld [vmem:[#allocation10 + $0x60] sm:$0xff]
    %v2286 = vld [vmem:[#allocation10 + $0x68] sm:$0xff]
    %v2287 = vld [vmem:[#allocation10 + $0x70] sm:$0xff]
    %v2288 = vld [vmem:[#allocation10 + $0x78] sm:$0xff]
    %v2289 = vld [vmem:[#allocation10 + $0x80] sm:$0xff]
    %v2290 = vld [vmem:[#allocation10 + $0x88] sm:$0xff]
    %v2291 = vld [vmem:[#allocation10 + $0x90] sm:$0xff]
    %v2292 = vld [vmem:[#allocation10 + $0x98] sm:$0xff]
    %v2293 = vld [vmem:[#allocation10 + $0xa0] sm:$0xff]
    %v2294 = vld [vmem:[#allocation10 + $0xa8] sm:$0xff]
    %v2295 = vld [vmem:[#allocation10 + $0xb0] sm:$0xff]
    %v2296 = vld [vmem:[#allocation10 + $0xb8] sm:$0xff]
    %v2297 = vld [vmem:[#allocation10 + $0xc0] sm:$0xff]
    %v2298 = vld [vmem:[#allocation10 + $0xc8] sm:$0xff]
    %v2299 = vld [vmem:[#allocation10 + $0xd0] sm:$0xff]
    %v2300 = vld [vmem:[#allocation10 + $0xd8] sm:$0xff]
    %v2301 = vld [vmem:[#allocation10 + $0xe0] sm:$0xff]
    %v2302 = vld [vmem:[#allocation10 + $0xe8] sm:$0xff]
    %v2303 = vld [vmem:[#allocation10 + $0xf0] sm:$0xff]
    %v2304 = vld [vmem:[#allocation10 + $0xf8] sm:$0xff]
    %v2337 = vunpack.c.l.b16 %v2273
    %v2338 = vunpack.c.h.b16 %v2273
    %v2339 = vunpack.c.l.b16 %v2274
    %v2340 = vunpack.c.h.b16 %v2274
    %v2341 = vunpack.c.l.b16 %v2275
    %v2342 = vunpack.c.h.b16 %v2275
    %v2343 = vunpack.c.l.b16 %v2276
    %v2344 = vunpack.c.h.b16 %v2276
    %v2345 = vunpack.c.l.b16 %v2277
    %v2346 = vunpack.c.h.b16 %v2277
    %v2347 = vunpack.c.l.b16 %v2278
    %v2348 = vunpack.c.h.b16 %v2278
    %v2349 = vunpack.c.l.b16 %v2279
    %v2350 = vunpack.c.h.b16 %v2279
    %v2351 = vunpack.c.l.b16 %v2280
    %v2352 = vunpack.c.h.b16 %v2280
    %v2353 = vunpack.c.l.b16 %v2281
    %v2354 = vunpack.c.h.b16 %v2281
    %v2355 = vunpack.c.l.b16 %v2282
    %v2356 = vunpack.c.h.b16 %v2282
    %v2357 = vunpack.c.l.b16 %v2283
    %v2358 = vunpack.c.h.b16 %v2283
    %v2359 = vunpack.c.l.b16 %v2284
    %v2360 = vunpack.c.h.b16 %v2284
    %v2361 = vunpack.c.l.b16 %v2285
    %v2362 = vunpack.c.h.b16 %v2285
    %v2363 = vunpack.c.l.b16 %v2286
    %v2364 = vunpack.c.h.b16 %v2286
    %v2365 = vunpack.c.l.b16 %v2287
    %v2366 = vunpack.c.h.b16 %v2287
    %v2367 = vunpack.c.l.b16 %v2288
    %v2368 = vunpack.c.h.b16 %v2288
    %v2369 = vunpack.c.l.b16 %v2289
    %v2370 = vunpack.c.h.b16 %v2289
    %v2371 = vunpack.c.l.b16 %v2290
    %v2372 = vunpack.c.h.b16 %v2290
    %v2373 = vunpack.c.l.b16 %v2291
    %v2374 = vunpack.c.h.b16 %v2291
    %v2375 = vunpack.c.l.b16 %v2292
    %v2376 = vunpack.c.h.b16 %v2292
    %v2377 = vunpack.c.l.b16 %v2293
    %v2378 = vunpack.c.h.b16 %v2293
    %v2379 = vunpack.c.l.b16 %v2294
    %v2380 = vunpack.c.h.b16 %v2294
    %v2381 = vunpack.c.l.b16 %v2295
    %v2382 = vunpack.c.h.b16 %v2295
    %v2383 = vunpack.c.l.b16 %v2296
    %v2384 = vunpack.c.h.b16 %v2296
    %v2385 = vunpack.c.l.b16 %v2297
    %v2386 = vunpack.c.h.b16 %v2297
    %v2387 = vunpack.c.l.b16 %v2298
    %v2388 = vunpack.c.h.b16 %v2298
    %v2389 = vunpack.c.l.b16 %v2299
    %v2390 = vunpack.c.h.b16 %v2299
    %v2391 = vunpack.c.l.b16 %v2300
    %v2392 = vunpack.c.h.b16 %v2300
    %v2393 = vunpack.c.l.b16 %v2301
    %v2394 = vunpack.c.h.b16 %v2301
    %v2395 = vunpack.c.l.b16 %v2302
    %v2396 = vunpack.c.h.b16 %v2302
    %v2397 = vunpack.c.l.b16 %v2303
    %v2398 = vunpack.c.h.b16 %v2303
    %v2399 = vunpack.c.l.b16 %v2304
    %v2400 = vunpack.c.h.b16 %v2304
    %v2401 = vpack.c.b16 %v2341, %v2337
    %v2402 = vpack.c.b16 %v2342, %v2338
    %v2403 = vpack.c.b16 %v2343, %v2339
    %v2404 = vpack.c.b16 %v2344, %v2340
    %v2405 = vpack.c.b16 %v2349, %v2345
    %v2406 = vpack.c.b16 %v2350, %v2346
    %v2407 = vpack.c.b16 %v2351, %v2347
    %v2408 = vpack.c.b16 %v2352, %v2348
    %v2409 = vpack.c.b16 %v2357, %v2353
    %v2410 = vpack.c.b16 %v2358, %v2354
    %v2411 = vpack.c.b16 %v2359, %v2355
    %v2412 = vpack.c.b16 %v2360, %v2356
    %v2413 = vpack.c.b16 %v2365, %v2361
    %v2414 = vpack.c.b16 %v2366, %v2362
    %v2415 = vpack.c.b16 %v2367, %v2363
    %v2416 = vpack.c.b16 %v2368, %v2364
    %v2417 = vpack.c.b16 %v2373, %v2369
    %v2418 = vpack.c.b16 %v2374, %v2370
    %v2419 = vpack.c.b16 %v2375, %v2371
    %v2420 = vpack.c.b16 %v2376, %v2372
    %v2421 = vpack.c.b16 %v2381, %v2377
    %v2422 = vpack.c.b16 %v2382, %v2378
    %v2423 = vpack.c.b16 %v2383, %v2379
    %v2424 = vpack.c.b16 %v2384, %v2380
    %v2425 = vpack.c.b16 %v2389, %v2385
    %v2426 = vpack.c.b16 %v2390, %v2386
    %v2427 = vpack.c.b16 %v2391, %v2387
    %v2428 = vpack.c.b16 %v2392, %v2388
    %v2429 = vpack.c.b16 %v2397, %v2393
    %v2430 = vpack.c.b16 %v2398, %v2394
    %v2431 = vpack.c.b16 %v2399, %v2395
    %v2432 = vpack.c.b16 %v2400, %v2396
    %2465 = vmatprep.subr.bf16.mxu0 %v2402
    %2466 = vmatpush1.bf16.msra.mxu0 %v2401
    %2467 = vmatprep.subr.bf16.mxu0 %v2406
    %2468 = vmatpush1.bf16.msra.mxu0 %v2405
    %2469 = vmatprep.subr.bf16.mxu0 %v2410
    %2470 = vmatpush1.bf16.msra.mxu0 %v2409
    %2471 = vmatprep.subr.bf16.mxu0 %v2414
    %2472 = vmatpush1.bf16.msra.mxu0 %v2413
    %2473 = vmatprep.subr.bf16.mxu0 %v2418
    %2474 = vmatpush1.bf16.msra.mxu0 %v2417
    %2475 = vmatprep.subr.bf16.mxu0 %v2422
    %2476 = vmatpush1.bf16.msra.mxu0 %v2421
    %2477 = vmatprep.subr.bf16.mxu0 %v2426
    %2478 = vmatpush1.bf16.msra.mxu0 %v2425
    %2479 = vmatprep.subr.bf16.mxu0 %v2430
    %2480 = vmatpush1.bf16.msra.mxu0 %v2429
    %2481 = vmatprep.subr.bf16.mxu0 0
    %2482 = vmatpush1.bf16.msra.mxu0 0
    %2483 = vmatprep.subr.bf16.mxu0 0
    %2484 = vmatpush1.bf16.msra.mxu0 0
    %2485 = vmatprep.subr.bf16.mxu0 0
    %2486 = vmatpush1.bf16.msra.mxu0 0
    %2487 = vmatprep.subr.bf16.mxu0 0
    %2488 = vmatpush1.bf16.msra.mxu0 0
    %2489 = vmatprep.subr.bf16.mxu0 0
    %2490 = vmatpush1.bf16.msra.mxu0 0
    %2491 = vmatprep.subr.bf16.mxu0 0
    %2492 = vmatpush1.bf16.msra.mxu0 0
    %2493 = vmatprep.subr.bf16.mxu0 0
    %2494 = vmatpush1.bf16.msra.mxu0 0
    %2495 = vmatprep.subr.bf16.mxu0 0
    %2496 = vmatpush1.bf16.msra.mxu0 0
    %2497 = vmatprep.mubr.bf16.mxu0 0
    %2498 = vmatmul.mubr.bf16.gmra.mrb[0].mxu0 %v2272
    %v2499 = vpop.f32.mrb[0].mxu0
    %v2500 = vadd.f32 0.0, %v2499
    %v2501 = vpop.f32.mrb[0].mxu0
    %v2502 = vadd.f32 0.0, %v2501
    %v2503 = vpop.f32.mrb[0].mxu0
    %v2504 = vpop.f32.mrb[0].mxu0
    %2505 = vdwg.mxu0
    %2506 = vmatprep.subr.bf16.mxu0 %v2404
    %2507 = vmatpush1.bf16.msra.mxu0 %v2403
    %2508 = vmatprep.subr.bf16.mxu0 %v2408
    %2509 = vmatpush1.bf16.msra.mxu0 %v2407
    %2510 = vmatprep.subr.bf16.mxu0 %v2412
    %2511 = vmatpush1.bf16.msra.mxu0 %v2411
    %2512 = vmatprep.subr.bf16.mxu0 %v2416
    %2513 = vmatpush1.bf16.msra.mxu0 %v2415
    %2514 = vmatprep.subr.bf16.mxu0 %v2420
    %2515 = vmatpush1.bf16.msra.mxu0 %v2419
    %2516 = vmatprep.subr.bf16.mxu0 %v2424
    %2517 = vmatpush1.bf16.msra.mxu0 %v2423
    %2518 = vmatprep.subr.bf16.mxu0 %v2428
    %2519 = vmatpush1.bf16.msra.mxu0 %v2427
    %2520 = vmatprep.subr.bf16.mxu0 %v2432
    %2521 = vmatpush1.bf16.msra.mxu0 %v2431
    %2522 = vmatprep.subr.bf16.mxu0 0
    %2523 = vmatpush1.bf16.msra.mxu0 0
    %2524 = vmatprep.subr.bf16.mxu0 0
    %2525 = vmatpush1.bf16.msra.mxu0 0
    %2526 = vmatprep.subr.bf16.mxu0 0
    %2527 = vmatpush1.bf16.msra.mxu0 0
    %2528 = vmatprep.subr.bf16.mxu0 0
    %2529 = vmatpush1.bf16.msra.mxu0 0
    %2530 = vmatprep.subr.bf16.mxu0 0
    %2531 = vmatpush1.bf16.msra.mxu0 0
    %2532 = vmatprep.subr.bf16.mxu0 0
    %2533 = vmatpush1.bf16.msra.mxu0 0
    %2534 = vmatprep.subr.bf16.mxu0 0
    %2535 = vmatpush1.bf16.msra.mxu0 0
    %2536 = vmatprep.subr.bf16.mxu0 0
    %2537 = vmatpush1.bf16.msra.mxu0 0
    %2538 = vmatprep.mubr.bf16.mxu0 0
    %2539 = vmatmul.mubr.bf16.gmra.mrb[0].mxu0 %v2272
    %v2540 = vpop.f32.mrb[0].mxu0
    %v2541 = vadd.f32 0.0, %v2540
    %v2542 = vpop.f32.mrb[0].mxu0
    %v2543 = vadd.f32 0.0, %v2542
    %v2544 = vpop.f32.mrb[0].mxu0
    %v2545 = vpop.f32.mrb[0].mxu0
    %2546 = vdwg.mxu0
    %v2547 = vadd.f32 %v2268, %v2500
    %v2548 = vadd.f32 %v2269, %v2502
    %v2549 = vadd.f32 %v2270, %v2541
    %v2550 = vadd.f32 %v2271, %v2543
    %v2551 = vxor.u32 %v2547, 2147483648
    %v2552 = vmul.f32 %v2551, 1.442695
    %v2553 = vpow.pop %v2552
    %v2554 = vadd.f32 %v2553, 1.0
    %v2555 = vrcp.pop %v2554
    %v2556 = vmul.f32 1.0, %v2555
    %v2557 = vxor.u32 %v2548, 2147483648
    %v2558 = vmul.f32 %v2557, 1.442695
    %v2559 = vpow.pop %v2558
    %v2560 = vadd.f32 %v2559, 1.0
    %v2561 = vrcp.pop %v2560
    %v2562 = vmul.f32 1.0, %v2561
    %v2563 = vtanh.pop %v2549
    %v2564 = vxor.u32 %v2550, 2147483648
    %v2565 = vmul.f32 %v2564, 1.442695
    %v2566 = vpow.pop %v2565
    %v2567 = vadd.f32 %v2566, 1.0
    %v2568 = vrcp.pop %v2567
    %v2569 = vmul.f32 1.0, %v2568
    %v2570 = vmul.f32 %v2562, %v2260
    %v2571 = vmul.f32 %v2556, %v2563
    %v2572 = vadd.f32 %v2570, %v2571
    %v2573 = vtanh.pop %v2572
    %v2574 = vmul.f32 %v2569, %v2573
    %s2575 = scalar_lea.vmem [#allocation12], 56
    %2576 = vst [vmem:[%s2575] sm:$0xff] %v2574
    %2577 = vst [vmem:[#allocation2] sm:$0xff] %v2574
    %2578 = vst [vmem:[#allocation3] sm:$0xff] %v2572
    %v2579 = vld [vmem:[#allocation3] sm:$0xff]
    %2580 = vst [vmem:[#allocation13] sm:$0xff] %v2579
    // Predicated region
    $region38: #{tpu_custom_call.1} parent=1 // pred_check
      _
    $region39: #{tpu_custom_call.1} parent=1 // pred_check_branch
      %2582 = sbr.rel (0) target = $region41
    $region40: #{tpu_custom_call.1} parent=1 // pred_region
      %s2584 = ssub.s32 1024, 1024
      %2585 = vsyncadd [#allocation6], %s2584
      %s2586 = sshll.u32 [#allocation12], 4
      %s2587 = int_to_ptr.vmem [resolvable:$true] %s2586
      %2592 = dma.vmem_to_hbm [thread:$0]  %s2587, 1024, %s4, [#allocation6], 128, 128, 8
    $region41: #{tpu_custom_call.1} parent=1 // pred_fallthru
      _
    // Predicated region
    $region42: #{tpu_custom_call.1} parent=1 // pred_check
      _
    $region43: #{tpu_custom_call.1} parent=1 // pred_check_branch
      %2594 = sbr.rel (0) target = $region45
    $region44: #{tpu_custom_call.1} parent=1 // pred_region
      %s2596 = ssub.s32 128, 128
      %2597 = vsyncadd [#allocation14], %s2596
      %s2599 = sshll.u32 [#allocation13], 4
      %s2600 = int_to_ptr.vmem [resolvable:$true] %s2599
      %2602 = dma.vmem_to_hbm [thread:$0]  %s2600, 128, %s5, [#allocation14]
    $region45: #{tpu_custom_call.1} parent=1 // pred_fallthru
      _
    // Predicated region
    $region46: #{tpu_custom_call.1} parent=1 // pred_check
      _
    $region47: #{tpu_custom_call.1} parent=1 // pred_check_branch
      %2604 = sbr.rel (0) target = $region49
    $region48: #{tpu_custom_call.1} parent=1 // pred_region
      %2605 = dma.done [#allocation6], 1024
    $region49: #{tpu_custom_call.1} parent=1 // pred_fallthru
      _
    // Predicated region
    $region50: #{tpu_custom_call.1} parent=1 // pred_check
      _
    $region51: #{tpu_custom_call.1} parent=1 // pred_check_branch
      %2607 = sbr.rel (0) target = $region53
    $region52: #{tpu_custom_call.1} parent=1 // pred_region
      %2608 = dma.done [#allocation14], 128
    $region53: #{tpu_custom_call.1} parent=1 // pred_fallthru
      _
    %2609 = vsyncpa [#allocation5], 1
    %2610 = vsyncpa [#allocation8], 1
    %2611 = vsyncpa [#allocation11], 1
    %2612 = vsyncpa [#allocation6], 1
    %2613 = vsyncpa [#allocation14], 1

</llo_original>
